<compile_context>
chip_gen: v6e
topology: v6e:2x2x1
jax: 0.10.0
libtpu: 0.0.40
codegen_flags: <defaults>
</compile_context>

<pallas_src>
import jax
import jax.numpy as jnp
from jax import lax
from jax.experimental import pallas as pl
from jax.experimental.pallas import tpu as pltpu

BN_EPS = 1e-5
LANE = 128


def _round_up(n, m):
    return (n + m - 1) // m * m


def _vmem_limit_bytes():
    """Chip-aware scoped-VMEM limit: capacity minus ~12.5% headroom, capped at 110 MiB."""
    cap = None
    try:
        cap = getattr(pltpu.get_tpu_info(), "vmem_capacity_bytes", None)
    except Exception:
        cap = None
    if not cap:
        cap = 64 * 1024 * 1024  # conservative (v7x-sized VMEM) when the query is unavailable
    return int(min(max(cap - cap // 8, 32 * 1024 * 1024), 110 * 1024 * 1024))


# --------------------------------- kernel ------------------------------------

def _make_kernel(L, B, T, N, matmul_dtype):
    BT = B * T
    inv_n = 1.0 / float(BT)

    def kernel(x_ref, m_ref, wl_ref, gl_ref, btl_ref, wf_ref, gf_ref, btf_ref, o_ref):
        x = x_ref[...].astype(jnp.float32)          # (C, N), zero on pad lanes

        # Lane-only masks (1, N), broadcast over the C (sublane) axis:
        #   m_prev: t-1 tap must not cross a batch boundary / come from a pad lane
        #   m_cent: lane holds valid data (j < B*T)
        #   m_next: t+1 tap must not cross a batch boundary / come from a pad lane
        m_prev = m_ref[0:1, :]
        m_cent = m_ref[1:2, :]
        m_next = m_ref[2:3, :]

        def conv_bn(h, w0, w1, w2, gamma, beta, relu):
            # k=3, pad=1 conv as three accumulating (C,C)@(C,N) MXU dots (no (3C,N) temp).
            x_m1 = (pltpu.roll(h, shift=1, axis=1) * m_prev).astype(matmul_dtype)      # x[t-1]
            x_c = (h * m_cent).astype(matmul_dtype)                                    # x[t]
            x_p1 = (pltpu.roll(h, shift=N - 1, axis=1) * m_next).astype(matmul_dtype)  # x[t+1]
            y = jnp.dot(w0, x_m1, preferred_element_type=jnp.float32)
            y = y + jnp.dot(w1, x_c, preferred_element_type=jnp.float32)
            y = y + jnp.dot(w2, x_p1, preferred_element_type=jnp.float32)              # (C, N) f32

            # One-pass training-mode BatchNorm1d stats over the B*T valid lanes.
            # Pad lanes of y are zero (all three taps are masked), so raw sums are exact.
            sum_y = jnp.sum(y, axis=1, keepdims=True)                # (C, 1)
            sum_y2 = jnp.sum(y * y, axis=1, keepdims=True)
            mean = sum_y * inv_n
            var = jnp.maximum(sum_y2 * inv_n - mean * mean, 0.0)     # guard tiny cancellation
            scale = gamma * lax.rsqrt(var + BN_EPS)                  # folded BN affine
            shift = beta - mean * scale
            out = y * scale + shift
            if relu:
                out = jnp.maximum(out, 0.0)
            return out

        h = x
        for i in range(L):                                           # stacked ConvNormRelu layers
            h = conv_bn(h, wl_ref[i, 0], wl_ref[i, 1], wl_ref[i, 2],
                        gl_ref[i], btl_ref[i], relu=True)
        h = conv_bn(h, wf_ref[0], wf_ref[1], wf_ref[2],
                    gf_ref[...], btf_ref[...], relu=False)
        o_ref[...] = jnp.maximum(h + x, 0.0).astype(o_ref.dtype)     # residual + ReLU, lane-dense

    return kernel


# -------------------------------- wrapper ------------------------------------

def res_cnr_stack(x, params, matmul_dtype=jnp.float32):
    """x: (B, C, T) (PyTorch NCL).  params = (wl, bl, gl, btl, wf, bf, gf, btf).

    matmul_dtype=jnp.bfloat16 halves MXU operand bytes on v5e/v6e/v7x (f32 accumulation);
    all VPU math stays f32.
    """
    B, C, T = x.shape
    wl, bl, gl, btl, wf, bf, gf, btf = params
    L = wl.shape[0]
    del bl, bf  # conv bias immediately before training-mode BN is cancelled by the mean

    BT = B * T
    N = _round_up(BT, LANE)  # lane-dense activation / output layout

    # (B, C, T) -> (C, B*T) slab, zero-padded on the lane axis to a multiple of 128.
    x_slab = jnp.transpose(x, (1, 0, 2)).reshape(C, BT)
    x_slab = jnp.pad(x_slab, ((0, 0), (0, N - BT)))

    # Lane-only tap masks, built once here (no in-kernel iota/modulo): (3, N) f32.
    j = jnp.arange(N, dtype=jnp.int32)
    pos = j % T
    valid = j < BT
    masks = jnp.stack([
        jnp.logical_and(valid, pos != 0),        # t-1 tap valid
        valid,                                   # center tap valid
        jnp.logical_and(valid, pos != T - 1),    # t+1 tap valid
    ]).astype(jnp.float32)

    # Pre-cast matmul-operand weights once (hoisted out of the kernel).
    wl_c = wl.astype(matmul_dtype)               # (L, 3, C_out, C_in)
    wf_c = wf.astype(matmul_dtype)               # (3, C_out, C_in)

    vmem = pl.BlockSpec(memory_space=pltpu.MemorySpace.VMEM)
    out_slab = pl.pallas_call(
        _make_kernel(L, B, T, N, matmul_dtype),
        out_shape=jax.ShapeDtypeStruct((C, N), x.dtype),
        in_specs=[vmem] * 8,
        out_specs=vmem,
        compiler_params=pltpu.CompilerParams(vmem_limit_bytes=_vmem_limit_bytes()),
    )(x_slab, masks, wl_c, gl, btl, wf_c, gf, btf)

    # (C, N) -> (B, C, T)
    return jnp.transpose(out_slab[:, :BT].reshape(C, B, T), (1, 0, 2))


# --------------------------- pure-JAX reference -------------------------------

def reference(x, params):
    wl, bl, gl, btl, wf, bf, gf, btf = params

    def conv(h, w3, b):
        w = jnp.transpose(w3, (1, 2, 0))  # (C_out, C_in, 3) == PyTorch Conv1d weight
        out = jax.lax.conv_general_dilated(
            h, w, window_strides=(1,), padding=[(1, 1)],
            dimension_numbers=("NCH", "OIH", "NCH"))
        return out + b[None]

    def bn(h, g, bt):
        mean = jnp.mean(h, axis=(0, 2), keepdims=True)
        var = jnp.mean((h - mean) ** 2, axis=(0, 2), keepdims=True)
        return (h - mean) * jax.lax.rsqrt(var + BN_EPS) * g[None] + bt[None]

    h = x
    for i in range(wl.shape[0]):
        h = jnp.maximum(bn(conv(h, wl[i], bl[i]), gl[i], btl[i]), 0.0)
    h = bn(conv(h, wf, bf), gf, btf)
    return jnp.maximum(h + x, 0.0)


# ----------------------------------- main -------------------------------------

if __name__ == "__main__":
    B, C, T, L = 2, 32, 16, 2   # batch, channels, sequence length, stacked layers

    key = jax.random.PRNGKey(0)
    ks = jax.random.split(key, 9)
    fan = 1.0 / float(jnp.sqrt(jnp.float32(C * 3)))

    # Conv weights stacked as (k, C_out, C_in) so wl[i, k] = PyTorch weight[:, :, k]
    wl = jax.random.uniform(ks[0], (L, 3, C, C), jnp.float32, -fan, fan)
    bl = jax.random.uniform(ks[1], (L, C, 1), jnp.float32, -fan, fan)
    gl = 1.0 + 0.1 * jax.random.normal(ks[2], (L, C, 1), jnp.float32)
    btl = 0.1 * jax.random.normal(ks[3], (L, C, 1), jnp.float32)
    wf = jax.random.uniform(ks[4], (3, C, C), jnp.float32, -fan, fan)
    bf = jax.random.uniform(ks[5], (C, 1), jnp.float32, -fan, fan)
    gf = 1.0 + 0.1 * jax.random.normal(ks[6], (C, 1), jnp.float32)
    btf = 0.1 * jax.random.normal(ks[7], (C, 1), jnp.float32)

    x = jax.random.normal(ks[8], (B, C, T), jnp.float32)
    params = (wl, bl, gl, btl, wf, bf, gf, btf)

    ref = reference(x, params)

    # f32 matmul path — strict check
    out = res_cnr_stack(x, params)
    jax.block_until_ready(out)
    err = float(jnp.max(jnp.abs(out - ref)))
    assert jnp.allclose(out, ref, atol=2e-4, rtol=2e-4), f"max abs err = {err}"

    # bf16 matmul-operand path (valid on v5e/v6e/v7x MXUs), f32 accumulation — loose check
    out_bf16 = res_cnr_stack(x, params, matmul_dtype=jnp.bfloat16)
    jax.block_until_ready(out_bf16)
    err_bf16 = float(jnp.max(jnp.abs(out_bf16 - ref)))
    assert err_bf16 < 0.1, f"bf16 max abs err = {err_bf16}"

    print("KERNEL_OK")
</pallas_src>

<mosaic_0001>
module attributes {stable_mosaic.version = 11 : i64} {
  func.func @kernel(%arg0: memref<32x128xf32, #tpu.memory_space<vmem>>, %arg1: memref<3x128xf32, #tpu.memory_space<vmem>>, %arg2: memref<2x3x32x32xf32, #tpu.memory_space<vmem>>, %arg3: memref<2x32x1xf32, #tpu.memory_space<vmem>>, %arg4: memref<2x32x1xf32, #tpu.memory_space<vmem>>, %arg5: memref<3x32x32xf32, #tpu.memory_space<vmem>>, %arg6: memref<32x1xf32, #tpu.memory_space<vmem>>, %arg7: memref<32x1xf32, #tpu.memory_space<vmem>>, %arg8: memref<32x128xf32, #tpu.memory_space<vmem>>) attributes {dimension_semantics = [], scalar_prefetch = 0 : i64, scratch_operands = 0 : i64, tpu.core_type = #tpu.core_type<tc>} {
    %c0 = arith.constant 0 : index
    %c0_0 = arith.constant 0 : index
    %0 = vector.load %arg0[%c0, %c0_0] : memref<32x128xf32, #tpu.memory_space<vmem>>, vector<32x128xf32>
    %c0_1 = arith.constant 0 : index
    %c0_2 = arith.constant 0 : index
    %1 = vector.load %arg1[%c0_1, %c0_2] : memref<3x128xf32, #tpu.memory_space<vmem>>, vector<1x128xf32>
    %c1 = arith.constant 1 : index
    %c0_3 = arith.constant 0 : index
    %2 = vector.load %arg1[%c1, %c0_3] : memref<3x128xf32, #tpu.memory_space<vmem>>, vector<1x128xf32>
    %c2 = arith.constant 2 : index
    %c0_4 = arith.constant 0 : index
    %3 = vector.load %arg1[%c2, %c0_4] : memref<3x128xf32, #tpu.memory_space<vmem>>, vector<1x128xf32>
    %c0_5 = arith.constant 0 : index
    %c0_6 = arith.constant 0 : index
    %c0_7 = arith.constant 0 : index
    %c0_8 = arith.constant 0 : index
    %4 = vector.load %arg2[%c0_5, %c0_6, %c0_7, %c0_8] : memref<2x3x32x32xf32, #tpu.memory_space<vmem>>, vector<1x1x32x32xf32>
    %5 = vector.shape_cast %4 : vector<1x1x32x32xf32> to vector<32x32xf32>
    %c0_9 = arith.constant 0 : index
    %c1_10 = arith.constant 1 : index
    %c0_11 = arith.constant 0 : index
    %c0_12 = arith.constant 0 : index
    %6 = vector.load %arg2[%c0_9, %c1_10, %c0_11, %c0_12] : memref<2x3x32x32xf32, #tpu.memory_space<vmem>>, vector<1x1x32x32xf32>
    %7 = vector.shape_cast %6 : vector<1x1x32x32xf32> to vector<32x32xf32>
    %c0_13 = arith.constant 0 : index
    %c2_14 = arith.constant 2 : index
    %c0_15 = arith.constant 0 : index
    %c0_16 = arith.constant 0 : index
    %8 = vector.load %arg2[%c0_13, %c2_14, %c0_15, %c0_16] : memref<2x3x32x32xf32, #tpu.memory_space<vmem>>, vector<1x1x32x32xf32>
    %9 = vector.shape_cast %8 : vector<1x1x32x32xf32> to vector<32x32xf32>
    %c0_17 = arith.constant 0 : index
    %c0_18 = arith.constant 0 : index
    %c0_19 = arith.constant 0 : index
    %10 = vector.load %arg3[%c0_17, %c0_18, %c0_19] : memref<2x32x1xf32, #tpu.memory_space<vmem>>, vector<1x32x1xf32>
    %11 = vector.shape_cast %10 : vector<1x32x1xf32> to vector<32x1xf32>
    %c0_20 = arith.constant 0 : index
    %c0_21 = arith.constant 0 : index
    %c0_22 = arith.constant 0 : index
    %12 = vector.load %arg4[%c0_20, %c0_21, %c0_22] : memref<2x32x1xf32, #tpu.memory_space<vmem>>, vector<1x32x1xf32>
    %13 = vector.shape_cast %12 : vector<1x32x1xf32> to vector<32x1xf32>
    %c1_i32 = arith.constant 1 : i32
    %14 = tpu.dynamic_rotate %0 by %c1_i32 dim 1 : vector<32x128xf32>, i32 -> vector<32x128xf32>
    %15 = vector.broadcast %1 : vector<1x128xf32> to vector<32x128xf32>
    %16 = arith.mulf %14, %15 : vector<32x128xf32>
    %17 = vector.broadcast %2 : vector<1x128xf32> to vector<32x128xf32>
    %18 = arith.mulf %0, %17 : vector<32x128xf32>
    %c127_i32 = arith.constant 127 : i32
    %19 = tpu.dynamic_rotate %0 by %c127_i32 dim 1 : vector<32x128xf32>, i32 -> vector<32x128xf32>
    %20 = vector.broadcast %3 : vector<1x128xf32> to vector<32x128xf32>
    %21 = arith.mulf %19, %20 : vector<32x128xf32>
    %cst = arith.constant dense<0.000000e+00> : vector<32x128xf32>
    %22 = tpu.matmul %5, %16, %cst {dimension_numbers = #tpu.dot_dimension_numbers<[1], [0], [0], [1], [0, 0, 1, 1], [], []>} : vector<32x32xf32>, vector<32x128xf32>, vector<32x128xf32> -> vector<32x128xf32>
    %cst_23 = arith.constant dense<0.000000e+00> : vector<32x128xf32>
    %23 = tpu.matmul %7, %18, %cst_23 {dimension_numbers = #tpu.dot_dimension_numbers<[1], [0], [0], [1], [0, 0, 1, 1], [], []>} : vector<32x32xf32>, vector<32x128xf32>, vector<32x128xf32> -> vector<32x128xf32>
    %24 = arith.addf %22, %23 : vector<32x128xf32>
    %cst_24 = arith.constant dense<0.000000e+00> : vector<32x128xf32>
    %25 = tpu.matmul %9, %21, %cst_24 {dimension_numbers = #tpu.dot_dimension_numbers<[1], [0], [0], [1], [0, 0, 1, 1], [], []>} : vector<32x32xf32>, vector<32x128xf32>, vector<32x128xf32> -> vector<32x128xf32>
    %26 = arith.addf %24, %25 : vector<32x128xf32>
    %cst_25 = arith.constant dense<0.000000e+00> : vector<32xf32>
    %27 = vector.multi_reduction <add>, %26, %cst_25 [1] : vector<32x128xf32> to vector<32xf32>
    %28 = vector.shape_cast %27 : vector<32xf32> to vector<32x1xf32>
    %29 = arith.mulf %26, %26 : vector<32x128xf32>
    %cst_26 = arith.constant dense<0.000000e+00> : vector<32xf32>
    %30 = vector.multi_reduction <add>, %29, %cst_26 [1] : vector<32x128xf32> to vector<32xf32>
    %31 = vector.shape_cast %30 : vector<32xf32> to vector<32x1xf32>
    %cst_27 = arith.constant 3.125000e-02 : f32
    %32 = vector.broadcast %cst_27 : f32 to vector<32x1xf32>
    %33 = arith.mulf %28, %32 : vector<32x1xf32>
    %cst_28 = arith.constant 3.125000e-02 : f32
    %34 = vector.broadcast %cst_28 : f32 to vector<32x1xf32>
    %35 = arith.mulf %31, %34 : vector<32x1xf32>
    %36 = arith.mulf %33, %33 : vector<32x1xf32>
    %37 = arith.subf %35, %36 : vector<32x1xf32>
    %cst_29 = arith.constant 0.000000e+00 : f32
    %38 = vector.broadcast %cst_29 : f32 to vector<32x1xf32>
    %39 = arith.maximumf %37, %38 : vector<32x1xf32>
    %cst_30 = arith.constant 9.99999974E-6 : f32
    %40 = vector.broadcast %cst_30 : f32 to vector<32x1xf32>
    %41 = arith.addf %39, %40 : vector<32x1xf32>
    %42 = math.rsqrt %41 : vector<32x1xf32>
    %43 = arith.mulf %11, %42 : vector<32x1xf32>
    %44 = arith.mulf %33, %43 : vector<32x1xf32>
    %45 = arith.subf %13, %44 : vector<32x1xf32>
    %46 = vector.broadcast %43 : vector<32x1xf32> to vector<32x128xf32>
    %47 = arith.mulf %26, %46 : vector<32x128xf32>
    %48 = vector.broadcast %45 : vector<32x1xf32> to vector<32x128xf32>
    %49 = arith.addf %47, %48 : vector<32x128xf32>
    %cst_31 = arith.constant 0.000000e+00 : f32
    %50 = vector.broadcast %cst_31 : f32 to vector<32x128xf32>
    %51 = arith.maximumf %49, %50 : vector<32x128xf32>
    %c1_32 = arith.constant 1 : index
    %c0_33 = arith.constant 0 : index
    %c0_34 = arith.constant 0 : index
    %c0_35 = arith.constant 0 : index
    %52 = vector.load %arg2[%c1_32, %c0_33, %c0_34, %c0_35] : memref<2x3x32x32xf32, #tpu.memory_space<vmem>>, vector<1x1x32x32xf32>
    %53 = vector.shape_cast %52 : vector<1x1x32x32xf32> to vector<32x32xf32>
    %c1_36 = arith.constant 1 : index
    %c1_37 = arith.constant 1 : index
    %c0_38 = arith.constant 0 : index
    %c0_39 = arith.constant 0 : index
    %54 = vector.load %arg2[%c1_36, %c1_37, %c0_38, %c0_39] : memref<2x3x32x32xf32, #tpu.memory_space<vmem>>, vector<1x1x32x32xf32>
    %55 = vector.shape_cast %54 : vector<1x1x32x32xf32> to vector<32x32xf32>
    %c1_40 = arith.constant 1 : index
    %c2_41 = arith.constant 2 : index
    %c0_42 = arith.constant 0 : index
    %c0_43 = arith.constant 0 : index
    %56 = vector.load %arg2[%c1_40, %c2_41, %c0_42, %c0_43] : memref<2x3x32x32xf32, #tpu.memory_space<vmem>>, vector<1x1x32x32xf32>
    %57 = vector.shape_cast %56 : vector<1x1x32x32xf32> to vector<32x32xf32>
    %c1_44 = arith.constant 1 : index
    %c0_45 = arith.constant 0 : index
    %c0_46 = arith.constant 0 : index
    %58 = vector.load %arg3[%c1_44, %c0_45, %c0_46] : memref<2x32x1xf32, #tpu.memory_space<vmem>>, vector<1x32x1xf32>
    %59 = vector.shape_cast %58 : vector<1x32x1xf32> to vector<32x1xf32>
    %c1_47 = arith.constant 1 : index
    %c0_48 = arith.constant 0 : index
    %c0_49 = arith.constant 0 : index
    %60 = vector.load %arg4[%c1_47, %c0_48, %c0_49] : memref<2x32x1xf32, #tpu.memory_space<vmem>>, vector<1x32x1xf32>
    %61 = vector.shape_cast %60 : vector<1x32x1xf32> to vector<32x1xf32>
    %c1_i32_50 = arith.constant 1 : i32
    %62 = tpu.dynamic_rotate %51 by %c1_i32_50 dim 1 : vector<32x128xf32>, i32 -> vector<32x128xf32>
    %63 = vector.broadcast %1 : vector<1x128xf32> to vector<32x128xf32>
    %64 = arith.mulf %62, %63 : vector<32x128xf32>
    %65 = vector.broadcast %2 : vector<1x128xf32> to vector<32x128xf32>
    %66 = arith.mulf %51, %65 : vector<32x128xf32>
    %c127_i32_51 = arith.constant 127 : i32
    %67 = tpu.dynamic_rotate %51 by %c127_i32_51 dim 1 : vector<32x128xf32>, i32 -> vector<32x128xf32>
    %68 = vector.broadcast %3 : vector<1x128xf32> to vector<32x128xf32>
    %69 = arith.mulf %67, %68 : vector<32x128xf32>
    %cst_52 = arith.constant dense<0.000000e+00> : vector<32x128xf32>
    %70 = tpu.matmul %53, %64, %cst_52 {dimension_numbers = #tpu.dot_dimension_numbers<[1], [0], [0], [1], [0, 0, 1, 1], [], []>} : vector<32x32xf32>, vector<32x128xf32>, vector<32x128xf32> -> vector<32x128xf32>
    %cst_53 = arith.constant dense<0.000000e+00> : vector<32x128xf32>
    %71 = tpu.matmul %55, %66, %cst_53 {dimension_numbers = #tpu.dot_dimension_numbers<[1], [0], [0], [1], [0, 0, 1, 1], [], []>} : vector<32x32xf32>, vector<32x128xf32>, vector<32x128xf32> -> vector<32x128xf32>
    %72 = arith.addf %70, %71 : vector<32x128xf32>
    %cst_54 = arith.constant dense<0.000000e+00> : vector<32x128xf32>
    %73 = tpu.matmul %57, %69, %cst_54 {dimension_numbers = #tpu.dot_dimension_numbers<[1], [0], [0], [1], [0, 0, 1, 1], [], []>} : vector<32x32xf32>, vector<32x128xf32>, vector<32x128xf32> -> vector<32x128xf32>
    %74 = arith.addf %72, %73 : vector<32x128xf32>
    %cst_55 = arith.constant dense<0.000000e+00> : vector<32xf32>
    %75 = vector.multi_reduction <add>, %74, %cst_55 [1] : vector<32x128xf32> to vector<32xf32>
    %76 = vector.shape_cast %75 : vector<32xf32> to vector<32x1xf32>
    %77 = arith.mulf %74, %74 : vector<32x128xf32>
    %cst_56 = arith.constant dense<0.000000e+00> : vector<32xf32>
    %78 = vector.multi_reduction <add>, %77, %cst_56 [1] : vector<32x128xf32> to vector<32xf32>
    %79 = vector.shape_cast %78 : vector<32xf32> to vector<32x1xf32>
    %cst_57 = arith.constant 3.125000e-02 : f32
    %80 = vector.broadcast %cst_57 : f32 to vector<32x1xf32>
    %81 = arith.mulf %76, %80 : vector<32x1xf32>
    %cst_58 = arith.constant 3.125000e-02 : f32
    %82 = vector.broadcast %cst_58 : f32 to vector<32x1xf32>
    %83 = arith.mulf %79, %82 : vector<32x1xf32>
    %84 = arith.mulf %81, %81 : vector<32x1xf32>
    %85 = arith.subf %83, %84 : vector<32x1xf32>
    %cst_59 = arith.constant 0.000000e+00 : f32
    %86 = vector.broadcast %cst_59 : f32 to vector<32x1xf32>
    %87 = arith.maximumf %85, %86 : vector<32x1xf32>
    %cst_60 = arith.constant 9.99999974E-6 : f32
    %88 = vector.broadcast %cst_60 : f32 to vector<32x1xf32>
    %89 = arith.addf %87, %88 : vector<32x1xf32>
    %90 = math.rsqrt %89 : vector<32x1xf32>
    %91 = arith.mulf %59, %90 : vector<32x1xf32>
    %92 = arith.mulf %81, %91 : vector<32x1xf32>
    %93 = arith.subf %61, %92 : vector<32x1xf32>
    %94 = vector.broadcast %91 : vector<32x1xf32> to vector<32x128xf32>
    %95 = arith.mulf %74, %94 : vector<32x128xf32>
    %96 = vector.broadcast %93 : vector<32x1xf32> to vector<32x128xf32>
    %97 = arith.addf %95, %96 : vector<32x128xf32>
    %cst_61 = arith.constant 0.000000e+00 : f32
    %98 = vector.broadcast %cst_61 : f32 to vector<32x128xf32>
    %99 = arith.maximumf %97, %98 : vector<32x128xf32>
    %c0_62 = arith.constant 0 : index
    %c0_63 = arith.constant 0 : index
    %c0_64 = arith.constant 0 : index
    %100 = vector.load %arg5[%c0_62, %c0_63, %c0_64] : memref<3x32x32xf32, #tpu.memory_space<vmem>>, vector<1x32x32xf32>
    %101 = vector.shape_cast %100 : vector<1x32x32xf32> to vector<32x32xf32>
    %c1_65 = arith.constant 1 : index
    %c0_66 = arith.constant 0 : index
    %c0_67 = arith.constant 0 : index
    %102 = vector.load %arg5[%c1_65, %c0_66, %c0_67] : memref<3x32x32xf32, #tpu.memory_space<vmem>>, vector<1x32x32xf32>
    %103 = vector.shape_cast %102 : vector<1x32x32xf32> to vector<32x32xf32>
    %c2_68 = arith.constant 2 : index
    %c0_69 = arith.constant 0 : index
    %c0_70 = arith.constant 0 : index
    %104 = vector.load %arg5[%c2_68, %c0_69, %c0_70] : memref<3x32x32xf32, #tpu.memory_space<vmem>>, vector<1x32x32xf32>
    %105 = vector.shape_cast %104 : vector<1x32x32xf32> to vector<32x32xf32>
    %c0_71 = arith.constant 0 : index
    %c0_72 = arith.constant 0 : index
    %106 = vector.load %arg6[%c0_71, %c0_72] : memref<32x1xf32, #tpu.memory_space<vmem>>, vector<32x1xf32>
    %c0_73 = arith.constant 0 : index
    %c0_74 = arith.constant 0 : index
    %107 = vector.load %arg7[%c0_73, %c0_74] : memref<32x1xf32, #tpu.memory_space<vmem>>, vector<32x1xf32>
    %c1_i32_75 = arith.constant 1 : i32
    %108 = tpu.dynamic_rotate %99 by %c1_i32_75 dim 1 : vector<32x128xf32>, i32 -> vector<32x128xf32>
    %109 = vector.broadcast %1 : vector<1x128xf32> to vector<32x128xf32>
    %110 = arith.mulf %108, %109 : vector<32x128xf32>
    %111 = vector.broadcast %2 : vector<1x128xf32> to vector<32x128xf32>
    %112 = arith.mulf %99, %111 : vector<32x128xf32>
    %c127_i32_76 = arith.constant 127 : i32
    %113 = tpu.dynamic_rotate %99 by %c127_i32_76 dim 1 : vector<32x128xf32>, i32 -> vector<32x128xf32>
    %114 = vector.broadcast %3 : vector<1x128xf32> to vector<32x128xf32>
    %115 = arith.mulf %113, %114 : vector<32x128xf32>
    %cst_77 = arith.constant dense<0.000000e+00> : vector<32x128xf32>
    %116 = tpu.matmul %101, %110, %cst_77 {dimension_numbers = #tpu.dot_dimension_numbers<[1], [0], [0], [1], [0, 0, 1, 1], [], []>} : vector<32x32xf32>, vector<32x128xf32>, vector<32x128xf32> -> vector<32x128xf32>
    %cst_78 = arith.constant dense<0.000000e+00> : vector<32x128xf32>
    %117 = tpu.matmul %103, %112, %cst_78 {dimension_numbers = #tpu.dot_dimension_numbers<[1], [0], [0], [1], [0, 0, 1, 1], [], []>} : vector<32x32xf32>, vector<32x128xf32>, vector<32x128xf32> -> vector<32x128xf32>
    %118 = arith.addf %116, %117 : vector<32x128xf32>
    %cst_79 = arith.constant dense<0.000000e+00> : vector<32x128xf32>
    %119 = tpu.matmul %105, %115, %cst_79 {dimension_numbers = #tpu.dot_dimension_numbers<[1], [0], [0], [1], [0, 0, 1, 1], [], []>} : vector<32x32xf32>, vector<32x128xf32>, vector<32x128xf32> -> vector<32x128xf32>
    %120 = arith.addf %118, %119 : vector<32x128xf32>
    %cst_80 = arith.constant dense<0.000000e+00> : vector<32xf32>
    %121 = vector.multi_reduction <add>, %120, %cst_80 [1] : vector<32x128xf32> to vector<32xf32>
    %122 = vector.shape_cast %121 : vector<32xf32> to vector<32x1xf32>
    %123 = arith.mulf %120, %120 : vector<32x128xf32>
    %cst_81 = arith.constant dense<0.000000e+00> : vector<32xf32>
    %124 = vector.multi_reduction <add>, %123, %cst_81 [1] : vector<32x128xf32> to vector<32xf32>
    %125 = vector.shape_cast %124 : vector<32xf32> to vector<32x1xf32>
    %cst_82 = arith.constant 3.125000e-02 : f32
    %126 = vector.broadcast %cst_82 : f32 to vector<32x1xf32>
    %127 = arith.mulf %122, %126 : vector<32x1xf32>
    %cst_83 = arith.constant 3.125000e-02 : f32
    %128 = vector.broadcast %cst_83 : f32 to vector<32x1xf32>
    %129 = arith.mulf %125, %128 : vector<32x1xf32>
    %130 = arith.mulf %127, %127 : vector<32x1xf32>
    %131 = arith.subf %129, %130 : vector<32x1xf32>
    %cst_84 = arith.constant 0.000000e+00 : f32
    %132 = vector.broadcast %cst_84 : f32 to vector<32x1xf32>
    %133 = arith.maximumf %131, %132 : vector<32x1xf32>
    %cst_85 = arith.constant 9.99999974E-6 : f32
    %134 = vector.broadcast %cst_85 : f32 to vector<32x1xf32>
    %135 = arith.addf %133, %134 : vector<32x1xf32>
    %136 = math.rsqrt %135 : vector<32x1xf32>
    %137 = arith.mulf %106, %136 : vector<32x1xf32>
    %138 = arith.mulf %127, %137 : vector<32x1xf32>
    %139 = arith.subf %107, %138 : vector<32x1xf32>
    %140 = vector.broadcast %137 : vector<32x1xf32> to vector<32x128xf32>
    %141 = arith.mulf %120, %140 : vector<32x128xf32>
    %142 = vector.broadcast %139 : vector<32x1xf32> to vector<32x128xf32>
    %143 = arith.addf %141, %142 : vector<32x128xf32>
    %144 = arith.addf %143, %0 : vector<32x128xf32>
    %cst_86 = arith.constant 0.000000e+00 : f32
    %145 = vector.broadcast %cst_86 : f32 to vector<32x128xf32>
    %146 = arith.maximumf %144, %145 : vector<32x128xf32>
    %c0_87 = arith.constant 0 : index
    %c0_88 = arith.constant 0 : index
    %147 = vector.load %arg8[%c0_87, %c0_88] : memref<32x128xf32, #tpu.memory_space<vmem>>, vector<32x128xf32>
    tpu.vector_store %arg8[%c0_87, %c0_88], %146 {strides = array<i32>} : memref<32x128xf32, #tpu.memory_space<vmem>>, vector<32x128xf32>,
    return
  }
}

</mosaic_0001>

<llo_original>
// kernel: tpu_custom_call.1
$region0: #{tpu_custom_call.1}
  #allocation0 [shape = 'u32[]', space=smem, size = 0x4, offset = 0x4, fixed_abs, tag = 'smem constant byte address 0x4 - core index']
  #allocation1 [shape = 'u32[144,128]{1,0:T(1,128)}', space=vmem, size = 0x12000, scoped, tag = 'internal scratch']
  %s0 = inlined_call_operand.hbm [shape: f32[32,128], index: 0, kind: input, shape index: {}]
  %s1 = inlined_call_operand.vmem [shape: f32[3,128], index: 1, kind: input, shape index: {}]
  %s2 = inlined_call_operand.vmem [shape: f32[2,3,32,32], index: 2, kind: input, shape index: {}]
  %s3 = inlined_call_operand.vmem [shape: f32[2,32,1], index: 3, kind: input, shape index: {}]
  %s4 = inlined_call_operand.vmem [shape: f32[2,32,1], index: 4, kind: input, shape index: {}]
  %s5 = inlined_call_operand.hbm [shape: f32[3,32,32], index: 5, kind: input, shape index: {}]
  %s6 = inlined_call_operand.vmem [shape: f32[32,1], index: 6, kind: input, shape index: {}]
  %s7 = inlined_call_operand.vmem [shape: f32[32,1], index: 7, kind: input, shape index: {}]
  %s8 = inlined_call_operand.hbm [shape: f32[32,128], index: 8, kind: output, shape index: {}]
  %s9 = sld [smem:[#allocation0]]
  $region50: #{tpu_custom_call.1} parent=0
    _
  %s11 = ssub.s32 1, %s9
  %s12 = scalar_select 0, %s11, %s9
  $region1: #{tpu_custom_call.1} parent=0
    #allocation2 [shape = 'u8[16384]{0}', space=vmem, size = 0x4000, scoped, tag = 'input window, operand 0, single buffered']
    #allocation3 [shape = 's32[1]{0}', space=sflag, size = 0x4, scoped, tag = 'scoped memory for tpu_custom_call.1']
    #allocation4 [shape = 's32[1]{0}', space=sflag, size = 0x4, scoped, tag = 'scoped memory for tpu_custom_call.1']
    #allocation5 [shape = 'u8[49152]{0}', space=vmem, size = 0xc000, scoped, tag = 'input window, operand 5, single buffered']
    #allocation6 [shape = 's32[1]{0}', space=sflag, size = 0x4, scoped, tag = 'scoped memory for tpu_custom_call.1']
    #allocation7 [shape = 'u8[16384]{0}', space=vmem, size = 0x4000, scoped, tag = 'output window, operand 0, single buffered']
    %13 = vsyncpa [#allocation3], 0
    %14 = vsyncpa [#allocation6], 0
    %15 = vsyncpa [#allocation4], 0
    // Predicated region
    $region2: #{tpu_custom_call.1} parent=1 // pred_check
      _
    $region3: #{tpu_custom_call.1} parent=1 // pred_check_branch
      %17 = sbr.rel (0) target = $region5
    $region4: #{tpu_custom_call.1} parent=1 // pred_region
      %s19 = ssub.s32 512, 512
      %20 = vsyncadd [#allocation3], %s19
      %s21 = sshll.u32 [#allocation2], 4
      %s22 = int_to_ptr.vmem [resolvable:$true] %s21
      %27 = dma.hbm_to_vmem [thread:$0]  %s0, 512, %s22, [#allocation3], 128, 128, 8
    $region5: #{tpu_custom_call.1} parent=1 // pred_fallthru
      _
    // Predicated region
    $region6: #{tpu_custom_call.1} parent=1 // pred_check
      _
    $region7: #{tpu_custom_call.1} parent=1 // pred_check_branch
      %29 = sbr.rel (0) target = $region9
    $region8: #{tpu_custom_call.1} parent=1 // pred_region
      _
    $region9: #{tpu_custom_call.1} parent=1 // pred_fallthru
      _
    // Predicated region
    $region10: #{tpu_custom_call.1} parent=1 // pred_check
      _
    $region11: #{tpu_custom_call.1} parent=1 // pred_check_branch
      %31 = sbr.rel (0) target = $region13
    $region12: #{tpu_custom_call.1} parent=1 // pred_region
      _
    $region13: #{tpu_custom_call.1} parent=1 // pred_fallthru
      _
    // Predicated region
    $region14: #{tpu_custom_call.1} parent=1 // pred_check
      _
    $region15: #{tpu_custom_call.1} parent=1 // pred_check_branch
      %33 = sbr.rel (0) target = $region17
    $region16: #{tpu_custom_call.1} parent=1 // pred_region
      _
    $region17: #{tpu_custom_call.1} parent=1 // pred_fallthru
      _
    // Predicated region
    $region18: #{tpu_custom_call.1} parent=1 // pred_check
      _
    $region19: #{tpu_custom_call.1} parent=1 // pred_check_branch
      %35 = sbr.rel (0) target = $region21
    $region20: #{tpu_custom_call.1} parent=1 // pred_region
      _
    $region21: #{tpu_custom_call.1} parent=1 // pred_fallthru
      _
    // Predicated region
    $region22: #{tpu_custom_call.1} parent=1 // pred_check
      _
    $region23: #{tpu_custom_call.1} parent=1 // pred_check_branch
      %37 = sbr.rel (0) target = $region25
    $region24: #{tpu_custom_call.1} parent=1 // pred_region
      %s39 = ssub.s32 1536, 1536
      %40 = vsyncadd [#allocation6], %s39
      %s41 = sshll.u32 [#allocation5], 4
      %s42 = int_to_ptr.vmem [resolvable:$true] %s41
      %47 = dma.hbm_to_vmem [thread:$0]  %s5, 1536, %s42, [#allocation6], 128, 128, 8
    $region25: #{tpu_custom_call.1} parent=1 // pred_fallthru
      _
    // Predicated region
    $region26: #{tpu_custom_call.1} parent=1 // pred_check
      _
    $region27: #{tpu_custom_call.1} parent=1 // pred_check_branch
      %49 = sbr.rel (0) target = $region29
    $region28: #{tpu_custom_call.1} parent=1 // pred_region
      _
    $region29: #{tpu_custom_call.1} parent=1 // pred_fallthru
      _
    // Predicated region
    $region30: #{tpu_custom_call.1} parent=1 // pred_check
      _
    $region31: #{tpu_custom_call.1} parent=1 // pred_check_branch
      %51 = sbr.rel (0) target = $region33
    $region32: #{tpu_custom_call.1} parent=1 // pred_region
      _
    $region33: #{tpu_custom_call.1} parent=1 // pred_fallthru
      _
    // Predicated region
    $region34: #{tpu_custom_call.1} parent=1 // pred_check
      _
    $region35: #{tpu_custom_call.1} parent=1 // pred_check_branch
      %53 = sbr.rel (0) target = $region37
    $region36: #{tpu_custom_call.1} parent=1 // pred_region
      %54 = dma.done [#allocation3], 512
    $region37: #{tpu_custom_call.1} parent=1 // pred_fallthru
      _
    // Predicated region
    $region38: #{tpu_custom_call.1} parent=1 // pred_check
      _
    $region39: #{tpu_custom_call.1} parent=1 // pred_check_branch
      %56 = sbr.rel (0) target = $region41
    $region40: #{tpu_custom_call.1} parent=1 // pred_region
      %57 = dma.done [#allocation6], 1536
    $region41: #{tpu_custom_call.1} parent=1 // pred_fallthru
      _
    %v58 = vld [vmem:[#allocation2] sm:$0xff]
    %v59 = vld [vmem:[#allocation2 + $0x8] sm:$0xff]
    %v60 = vld [vmem:[#allocation2 + $0x10] sm:$0xff]
    %v61 = vld [vmem:[#allocation2 + $0x18] sm:$0xff]
    %v62 = vld [vmem:[%s1] sm:$0x1]
    %v63 = vld [vmem:[%s1 + $0x1] sm:$0x1]
    %v64 = vld [vmem:[%s1 + $0x2] sm:$0x1]
    %v65 = vld [vmem:[%s2] sm:$0xff]
    %v66 = vld [vmem:[%s2 + $0x8] sm:$0xff]
    %v67 = vld [vmem:[%s2 + $0x10] sm:$0xff]
    %v68 = vld [vmem:[%s2 + $0x18] sm:$0xff]
    %s69 = scalar_lea.vmem %s2, 32
    %v70 = vld [vmem:[%s69] sm:$0xff]
    %v71 = vld [vmem:[%s69 + $0x8] sm:$0xff]
    %v72 = vld [vmem:[%s69 + $0x10] sm:$0xff]
    %v73 = vld [vmem:[%s69 + $0x18] sm:$0xff]
    %s74 = scalar_lea.vmem %s2, 64
    %v75 = vld [vmem:[%s74] sm:$0xff]
    %v76 = vld [vmem:[%s74 + $0x8] sm:$0xff]
    %v77 = vld [vmem:[%s74 + $0x10] sm:$0xff]
    %v78 = vld [vmem:[%s74 + $0x18] sm:$0xff]
    %v79 = vld [vmem:[%s3] sm:$0xff]
    %v80 = vld [vmem:[%s3 + $0x8] sm:$0xff]
    %v81 = vld [vmem:[%s3 + $0x10] sm:$0xff]
    %v82 = vld [vmem:[%s3 + $0x18] sm:$0xff]
    %v83 = vld [vmem:[%s4] sm:$0xff]
    %v84 = vld [vmem:[%s4 + $0x8] sm:$0xff]
    %v85 = vld [vmem:[%s4 + $0x10] sm:$0xff]
    %v86 = vld [vmem:[%s4 + $0x18] sm:$0xff]
    %87 = vrot.lane.b32.xlu0 %v58, 1
    %v88 = vpop.permute.xlu0 %87
    %89 = vrot.lane.b32.xlu0 %v59, 1
    %v90 = vpop.permute.xlu0 %89
    %91 = vrot.lane.b32.xlu0 %v60, 1
    %v92 = vpop.permute.xlu0 %91
    %93 = vrot.lane.b32.xlu0 %v61, 1
    %v94 = vpop.permute.xlu0 %93
    %v95 = vlaneseq
    %v96 = vshrl.u32 %v95, 7
    %v97 = vsub.s32 0, %v96
    %v98 = vrot.slane %v62, %v97
    %v99 = vmul.f32 %v88, %v98
    %v100 = vmul.f32 %v90, %v98
    %v101 = vmul.f32 %v92, %v98
    %v102 = vmul.f32 %v94, %v98
    %v103 = vlaneseq
    %v104 = vshrl.u32 %v103, 7
    %v105 = vsub.s32 0, %v104
    %v106 = vrot.slane %v63, %v105
    %v107 = vmul.f32 %v58, %v106
    %v108 = vmul.f32 %v59, %v106
    %v109 = vmul.f32 %v60, %v106
    %v110 = vmul.f32 %v61, %v106
    %111 = vrot.lane.b32.xlu0 %v58, 127
    %v112 = vpop.permute.xlu0 %111
    %113 = vrot.lane.b32.xlu0 %v59, 127
    %v114 = vpop.permute.xlu0 %113
    %115 = vrot.lane.b32.xlu0 %v60, 127
    %v116 = vpop.permute.xlu0 %115
    %117 = vrot.lane.b32.xlu0 %v61, 127
    %v118 = vpop.permute.xlu0 %117
    %v119 = vlaneseq
    %v120 = vshrl.u32 %v119, 7
    %v121 = vsub.s32 0, %v120
    %v122 = vrot.slane %v64, %v121
    %v123 = vmul.f32 %v112, %v122
    %v124 = vmul.f32 %v114, %v122
    %v125 = vmul.f32 %v116, %v122
    %v126 = vmul.f32 %v118, %v122
    %vm127 = vcmask 261120
    %v129 = vsel %vm127, %v70, 0
    %v132 = vsel %vm127, %v71, 0
    %v135 = vsel %vm127, %v72, 0
    %v138 = vsel %vm127, %v73, 0
    %140 = vmatprep.subr.mxu0 0.0
    %141 = vmatpush1.msra.mxu0 0.0
    %142 = vmatprep.subr.mxu0 0.0
    %143 = vmatpush1.msra.mxu0 0.0
    %144 = vmatprep.subr.mxu0 0.0
    %145 = vmatpush1.msra.mxu0 0.0
    %146 = vmatprep.subr.mxu0 0.0
    %147 = vmatpush1.msra.mxu0 0.0
    %148 = vmatprep.subr.mxu0 0.0
    %149 = vmatpush1.msra.mxu0 0.0
    %150 = vmatprep.subr.mxu0 0.0
    %151 = vmatpush1.msra.mxu0 0.0
    %152 = vmatprep.subr.mxu0 0.0
    %153 = vmatpush1.msra.mxu0 0.0
    %154 = vmatprep.subr.mxu0 0.0
    %155 = vmatpush1.msra.mxu0 0.0
    %156 = vmatprep.subr.mxu0 0.0
    %157 = vmatpush1.msra.mxu0 0.0
    %158 = vmatprep.subr.mxu0 0.0
    %159 = vmatpush1.msra.mxu0 0.0
    %160 = vmatprep.subr.mxu0 0.0
    %161 = vmatpush1.msra.mxu0 0.0
    %162 = vmatprep.subr.mxu0 0.0
    %163 = vmatpush1.msra.mxu0 0.0
    %164 = vmatprep.subr.mxu0 0.0
    %165 = vmatpush1.msra.mxu0 %v110
    %166 = vmatprep.subr.mxu0 0.0
    %167 = vmatpush1.msra.mxu0 %v109
    %168 = vmatprep.subr.mxu0 0.0
    %169 = vmatpush1.msra.mxu0 %v108
    %170 = vmatprep.subr.mxu0 0.0
    %171 = vmatpush1.msra.mxu0 %v107
    %172 = vmatprep.subr.mxu0 0.0
    %173 = vmatpush2.msra.mxu0 0.0
    %174 = vmatprep.subr.mxu0 0.0
    %175 = vmatpush2.msra.mxu0 0.0
    %176 = vmatprep.subr.mxu0 0.0
    %177 = vmatpush2.msra.mxu0 0.0
    %178 = vmatprep.subr.mxu0 0.0
    %179 = vmatpush2.msra.mxu0 0.0
    %180 = vmatprep.subr.mxu0 0.0
    %181 = vmatpush2.msra.mxu0 0.0
    %182 = vmatprep.subr.mxu0 0.0
    %183 = vmatpush2.msra.mxu0 0.0
    %184 = vmatprep.subr.mxu0 0.0
    %185 = vmatpush2.msra.mxu0 0.0
    %186 = vmatprep.subr.mxu0 0.0
    %187 = vmatpush2.msra.mxu0 0.0
    %188 = vmatprep.subr.mxu0 0.0
    %189 = vmatpush2.msra.mxu0 0.0
    %190 = vmatprep.subr.mxu0 0.0
    %191 = vmatpush2.msra.mxu0 0.0
    %192 = vmatprep.subr.mxu0 0.0
    %193 = vmatpush2.msra.mxu0 0.0
    %194 = vmatprep.subr.mxu0 0.0
    %195 = vmatpush2.msra.mxu0 0.0
    %196 = vmatprep.subr.mxu0 0.0
    %197 = vmatpush2.msra.mxu0 0.0
    %198 = vmatprep.subr.mxu0 0.0
    %199 = vmatpush2.msra.mxu0 0.0
    %200 = vmatprep.subr.mxu0 0.0
    %201 = vmatpush2.msra.mxu0 0.0
    %202 = vmatprep.subr.mxu0 0.0
    %203 = vmatpush2.msra.mxu0 0.0
    %204 = vmatprep.mubr.f32.mxu0 0.0
    %205 = vmatmul.mubr.f32.gmra.mxu0 %v129
    %v206 = vpop.f32.mrf.mxu0
    %v207 = vadd.f32 0.0, %v206
    %v208 = vpop.f32.mrf.mxu0
    %209 = vmatprep.mubr.f32.mxu0 0.0
    %210 = vmatmul.mubr.f32.gmra.mxu0 %v132
    %v211 = vpop.f32.mrf.mxu0
    %v212 = vadd.f32 0.0, %v211
    %v213 = vpop.f32.mrf.mxu0
    %214 = vmatprep.mubr.f32.mxu0 0.0
    %215 = vmatmul.mubr.f32.gmra.mxu0 %v135
    %v216 = vpop.f32.mrf.mxu0
    %v217 = vadd.f32 0.0, %v216
    %v218 = vpop.f32.mrf.mxu0
    %219 = vmatprep.mubr.f32.mxu0 0.0
    %220 = vmatmul.mubr.f32.gmra.mxu0 %v138
    %v221 = vpop.f32.mrf.mxu0
    %v222 = vadd.f32 0.0, %v221
    %v223 = vpop.f32.mrf.mxu0
    %224 = vdwg.mxu0
    %v226 = vsel %vm127, %v65, 0
    %v229 = vsel %vm127, %v66, 0
    %v232 = vsel %vm127, %v67, 0
    %v235 = vsel %vm127, %v68, 0
    %237 = vmatprep.subr.mxu0 0.0
    %238 = vmatpush1.msra.mxu0 0.0
    %239 = vmatprep.subr.mxu0 0.0
    %240 = vmatpush1.msra.mxu0 0.0
    %241 = vmatprep.subr.mxu0 0.0
    %242 = vmatpush1.msra.mxu0 0.0
    %243 = vmatprep.subr.mxu0 0.0
    %244 = vmatpush1.msra.mxu0 0.0
    %245 = vmatprep.subr.mxu0 0.0
    %246 = vmatpush1.msra.mxu0 0.0
    %247 = vmatprep.subr.mxu0 0.0
    %248 = vmatpush1.msra.mxu0 0.0
    %249 = vmatprep.subr.mxu0 0.0
    %250 = vmatpush1.msra.mxu0 0.0
    %251 = vmatprep.subr.mxu0 0.0
    %252 = vmatpush1.msra.mxu0 0.0
    %253 = vmatprep.subr.mxu0 0.0
    %254 = vmatpush1.msra.mxu0 0.0
    %255 = vmatprep.subr.mxu0 0.0
    %256 = vmatpush1.msra.mxu0 0.0
    %257 = vmatprep.subr.mxu0 0.0
    %258 = vmatpush1.msra.mxu0 0.0
    %259 = vmatprep.subr.mxu0 0.0
    %260 = vmatpush1.msra.mxu0 0.0
    %261 = vmatprep.subr.mxu0 0.0
    %262 = vmatpush1.msra.mxu0 %v102
    %263 = vmatprep.subr.mxu0 0.0
    %264 = vmatpush1.msra.mxu0 %v101
    %265 = vmatprep.subr.mxu0 0.0
    %266 = vmatpush1.msra.mxu0 %v100
    %267 = vmatprep.subr.mxu0 0.0
    %268 = vmatpush1.msra.mxu0 %v99
    %269 = vmatprep.subr.mxu0 0.0
    %270 = vmatpush2.msra.mxu0 0.0
    %271 = vmatprep.subr.mxu0 0.0
    %272 = vmatpush2.msra.mxu0 0.0
    %273 = vmatprep.subr.mxu0 0.0
    %274 = vmatpush2.msra.mxu0 0.0
    %275 = vmatprep.subr.mxu0 0.0
    %276 = vmatpush2.msra.mxu0 0.0
    %277 = vmatprep.subr.mxu0 0.0
    %278 = vmatpush2.msra.mxu0 0.0
    %279 = vmatprep.subr.mxu0 0.0
    %280 = vmatpush2.msra.mxu0 0.0
    %281 = vmatprep.subr.mxu0 0.0
    %282 = vmatpush2.msra.mxu0 0.0
    %283 = vmatprep.subr.mxu0 0.0
    %284 = vmatpush2.msra.mxu0 0.0
    %285 = vmatprep.subr.mxu0 0.0
    %286 = vmatpush2.msra.mxu0 0.0
    %287 = vmatprep.subr.mxu0 0.0
    %288 = vmatpush2.msra.mxu0 0.0
    %289 = vmatprep.subr.mxu0 0.0
    %290 = vmatpush2.msra.mxu0 0.0
    %291 = vmatprep.subr.mxu0 0.0
    %292 = vmatpush2.msra.mxu0 0.0
    %293 = vmatprep.subr.mxu0 0.0
    %294 = vmatpush2.msra.mxu0 0.0
    %295 = vmatprep.subr.mxu0 0.0
    %296 = vmatpush2.msra.mxu0 0.0
    %297 = vmatprep.subr.mxu0 0.0
    %298 = vmatpush2.msra.mxu0 0.0
    %299 = vmatprep.subr.mxu0 0.0
    %300 = vmatpush2.msra.mxu0 0.0
    %301 = vmatprep.mubr.f32.mxu0 0.0
    %302 = vmatmul.mubr.f32.gmra.mxu0 %v226
    %v303 = vpop.f32.mrf.mxu0
    %v304 = vadd.f32 %v207, %v303
    %v305 = vpop.f32.mrf.mxu0
    %306 = vmatprep.mubr.f32.mxu0 0.0
    %307 = vmatmul.mubr.f32.gmra.mxu0 %v229
    %v308 = vpop.f32.mrf.mxu0
    %v309 = vadd.f32 %v212, %v308
    %v310 = vpop.f32.mrf.mxu0
    %311 = vmatprep.mubr.f32.mxu0 0.0
    %312 = vmatmul.mubr.f32.gmra.mxu0 %v232
    %v313 = vpop.f32.mrf.mxu0
    %v314 = vadd.f32 %v217, %v313
    %v315 = vpop.f32.mrf.mxu0
    %316 = vmatprep.mubr.f32.mxu0 0.0
    %317 = vmatmul.mubr.f32.gmra.mxu0 %v235
    %v318 = vpop.f32.mrf.mxu0
    %v319 = vadd.f32 %v222, %v318
    %v320 = vpop.f32.mrf.mxu0
    %321 = vdwg.mxu0
    %v323 = vsel %vm127, %v75, 0
    %v326 = vsel %vm127, %v76, 0
    %v329 = vsel %vm127, %v77, 0
    %v332 = vsel %vm127, %v78, 0
    %334 = vmatprep.subr.mxu0 0.0
    %335 = vmatpush1.msra.mxu0 0.0
    %336 = vmatprep.subr.mxu0 0.0
    %337 = vmatpush1.msra.mxu0 0.0
    %338 = vmatprep.subr.mxu0 0.0
    %339 = vmatpush1.msra.mxu0 0.0
    %340 = vmatprep.subr.mxu0 0.0
    %341 = vmatpush1.msra.mxu0 0.0
    %342 = vmatprep.subr.mxu0 0.0
    %343 = vmatpush1.msra.mxu0 0.0
    %344 = vmatprep.subr.mxu0 0.0
    %345 = vmatpush1.msra.mxu0 0.0
    %346 = vmatprep.subr.mxu0 0.0
    %347 = vmatpush1.msra.mxu0 0.0
    %348 = vmatprep.subr.mxu0 0.0
    %349 = vmatpush1.msra.mxu0 0.0
    %350 = vmatprep.subr.mxu0 0.0
    %351 = vmatpush1.msra.mxu0 0.0
    %352 = vmatprep.subr.mxu0 0.0
    %353 = vmatpush1.msra.mxu0 0.0
    %354 = vmatprep.subr.mxu0 0.0
    %355 = vmatpush1.msra.mxu0 0.0
    %356 = vmatprep.subr.mxu0 0.0
    %357 = vmatpush1.msra.mxu0 0.0
    %358 = vmatprep.subr.mxu0 0.0
    %359 = vmatpush1.msra.mxu0 %v126
    %360 = vmatprep.subr.mxu0 0.0
    %361 = vmatpush1.msra.mxu0 %v125
    %362 = vmatprep.subr.mxu0 0.0
    %363 = vmatpush1.msra.mxu0 %v124
    %364 = vmatprep.subr.mxu0 0.0
    %365 = vmatpush1.msra.mxu0 %v123
    %366 = vmatprep.subr.mxu0 0.0
    %367 = vmatpush2.msra.mxu0 0.0
    %368 = vmatprep.subr.mxu0 0.0
    %369 = vmatpush2.msra.mxu0 0.0
    %370 = vmatprep.subr.mxu0 0.0
    %371 = vmatpush2.msra.mxu0 0.0
    %372 = vmatprep.subr.mxu0 0.0
    %373 = vmatpush2.msra.mxu0 0.0
    %374 = vmatprep.subr.mxu0 0.0
    %375 = vmatpush2.msra.mxu0 0.0
    %376 = vmatprep.subr.mxu0 0.0
    %377 = vmatpush2.msra.mxu0 0.0
    %378 = vmatprep.subr.mxu0 0.0
    %379 = vmatpush2.msra.mxu0 0.0
    %380 = vmatprep.subr.mxu0 0.0
    %381 = vmatpush2.msra.mxu0 0.0
    %382 = vmatprep.subr.mxu0 0.0
    %383 = vmatpush2.msra.mxu0 0.0
    %384 = vmatprep.subr.mxu0 0.0
    %385 = vmatpush2.msra.mxu0 0.0
    %386 = vmatprep.subr.mxu0 0.0
    %387 = vmatpush2.msra.mxu0 0.0
    %388 = vmatprep.subr.mxu0 0.0
    %389 = vmatpush2.msra.mxu0 0.0
    %390 = vmatprep.subr.mxu0 0.0
    %391 = vmatpush2.msra.mxu0 0.0
    %392 = vmatprep.subr.mxu0 0.0
    %393 = vmatpush2.msra.mxu0 0.0
    %394 = vmatprep.subr.mxu0 0.0
    %395 = vmatpush2.msra.mxu0 0.0
    %396 = vmatprep.subr.mxu0 0.0
    %397 = vmatpush2.msra.mxu0 0.0
    %398 = vmatprep.mubr.f32.mxu0 0.0
    %399 = vmatmul.mubr.f32.gmra.mxu0 %v323
    %v400 = vpop.f32.mrf.mxu0
    %v401 = vadd.f32 0.0, %v400
    %v402 = vpop.f32.mrf.mxu0
    %403 = vmatprep.mubr.f32.mxu0 0.0
    %404 = vmatmul.mubr.f32.gmra.mxu0 %v326
    %v405 = vpop.f32.mrf.mxu0
    %v406 = vadd.f32 0.0, %v405
    %v407 = vpop.f32.mrf.mxu0
    %408 = vmatprep.mubr.f32.mxu0 0.0
    %409 = vmatmul.mubr.f32.gmra.mxu0 %v329
    %v410 = vpop.f32.mrf.mxu0
    %v411 = vadd.f32 0.0, %v410
    %v412 = vpop.f32.mrf.mxu0
    %413 = vmatprep.mubr.f32.mxu0 0.0
    %414 = vmatmul.mubr.f32.gmra.mxu0 %v332
    %v415 = vpop.f32.mrf.mxu0
    %v416 = vadd.f32 0.0, %v415
    %v417 = vpop.f32.mrf.mxu0
    %418 = vdwg.mxu0
    %v419 = vadd.f32 %v304, %v401
    %v420 = vadd.f32 %v309, %v406
    %v421 = vadd.f32 %v314, %v411
    %v422 = vadd.f32 %v319, %v416
    %423 = vadd.xlane.f32.xlu0 %v419
    %v424 = vpop.xlane.xlu0 %423
    %425 = vadd.xlane.f32.xlu0 %v420
    %v426 = vpop.xlane.xlu0 %425
    %427 = vadd.xlane.f32.xlu0 %v421
    %v428 = vpop.xlane.xlu0 %427
    %429 = vadd.xlane.f32.xlu0 %v422
    %v430 = vpop.xlane.xlu0 %429
    %v431 = vmul.f32 %v419, %v419
    %v432 = vmul.f32 %v420, %v420
    %v433 = vmul.f32 %v421, %v421
    %v434 = vmul.f32 %v422, %v422
    %435 = vadd.xlane.f32.xlu0 %v431
    %v436 = vpop.xlane.xlu0 %435
    %437 = vadd.xlane.f32.xlu0 %v432
    %v438 = vpop.xlane.xlu0 %437
    %439 = vadd.xlane.f32.xlu0 %v433
    %v440 = vpop.xlane.xlu0 %439
    %441 = vadd.xlane.f32.xlu0 %v434
    %v442 = vpop.xlane.xlu0 %441
    %v443 = vmul.f32 %v424, 0.03125
    %v444 = vmul.f32 %v426, 0.03125
    %v445 = vmul.f32 %v428, 0.03125
    %v446 = vmul.f32 %v430, 0.03125
    %v447 = vmul.f32 %v436, 0.03125
    %v448 = vmul.f32 %v438, 0.03125
    %v449 = vmul.f32 %v440, 0.03125
    %v450 = vmul.f32 %v442, 0.03125
    %v451 = vmul.f32 %v443, %v443
    %v452 = vmul.f32 %v444, %v444
    %v453 = vmul.f32 %v445, %v445
    %v454 = vmul.f32 %v446, %v446
    %v455 = vsub.f32 %v447, %v451
    %v456 = vsub.f32 %v448, %v452
    %v457 = vsub.f32 %v449, %v453
    %v458 = vsub.f32 %v450, %v454
    %v459 = vmax.f32 %v455, 0.0
    %v460 = vmax.f32 %v456, 0.0
    %v461 = vmax.f32 %v457, 0.0
    %v462 = vmax.f32 %v458, 0.0
    %v463 = vadd.f32 %v459, 1e-05
    %v464 = vadd.f32 %v460, 1e-05
    %v465 = vadd.f32 %v461, 1e-05
    %v466 = vadd.f32 %v462, 1e-05
    %v467 = vrsqrt.pop %v463
    %v468 = vrsqrt.pop %v464
    %v469 = vrsqrt.pop %v465
    %v470 = vrsqrt.pop %v466
    %v471 = vmul.f32 %v79, %v467
    %v472 = vmul.f32 %v80, %v468
    %v473 = vmul.f32 %v81, %v469
    %v474 = vmul.f32 %v82, %v470
    %v475 = vmul.f32 %v443, %v471
    %v476 = vmul.f32 %v444, %v472
    %v477 = vmul.f32 %v445, %v473
    %v478 = vmul.f32 %v446, %v474
    %v479 = vsub.f32 %v83, %v475
    %v480 = vsub.f32 %v84, %v476
    %v481 = vsub.f32 %v85, %v477
    %v482 = vsub.f32 %v86, %v478
    %484 = vset.pattern.permute.xlu0 0
    %485 = vperm.xlu0 %484, %v471
    %v486 = vpop.permute.xlu0 %485
    %489 = vset.pattern.permute.xlu0 0
    %490 = vperm.xlu0 %489, %v472
    %v491 = vpop.permute.xlu0 %490
    %494 = vset.pattern.permute.xlu0 0
    %495 = vperm.xlu0 %494, %v473
    %v496 = vpop.permute.xlu0 %495
    %499 = vset.pattern.permute.xlu0 0
    %500 = vperm.xlu0 %499, %v474
    %v501 = vpop.permute.xlu0 %500
    %v503 = vmul.f32 %v419, %v486
    %v504 = vmul.f32 %v420, %v491
    %v505 = vmul.f32 %v421, %v496
    %v506 = vmul.f32 %v422, %v501
    %508 = vset.pattern.permute.xlu0 0
    %509 = vperm.xlu0 %508, %v479
    %v510 = vpop.permute.xlu0 %509
    %513 = vset.pattern.permute.xlu0 0
    %514 = vperm.xlu0 %513, %v480
    %v515 = vpop.permute.xlu0 %514
    %518 = vset.pattern.permute.xlu0 0
    %519 = vperm.xlu0 %518, %v481
    %v520 = vpop.permute.xlu0 %519
    %523 = vset.pattern.permute.xlu0 0
    %524 = vperm.xlu0 %523, %v482
    %v525 = vpop.permute.xlu0 %524
    %v527 = vadd.f32 %v503, %v510
    %v528 = vadd.f32 %v504, %v515
    %v529 = vadd.f32 %v505, %v520
    %v530 = vadd.f32 %v506, %v525
    %v531 = vmax.f32 %v527, 0.0
    %v532 = vmax.f32 %v528, 0.0
    %v533 = vmax.f32 %v529, 0.0
    %v534 = vmax.f32 %v530, 0.0
    %s535 = scalar_lea.vmem %s2, 96
    %v536 = vld [vmem:[%s535] sm:$0xff]
    %v537 = vld [vmem:[%s535 + $0x8] sm:$0xff]
    %v538 = vld [vmem:[%s535 + $0x10] sm:$0xff]
    %v539 = vld [vmem:[%s535 + $0x18] sm:$0xff]
    %s540 = scalar_lea.vmem %s2, 128
    %v541 = vld [vmem:[%s540] sm:$0xff]
    %v542 = vld [vmem:[%s540 + $0x8] sm:$0xff]
    %v543 = vld [vmem:[%s540 + $0x10] sm:$0xff]
    %v544 = vld [vmem:[%s540 + $0x18] sm:$0xff]
    %s545 = scalar_lea.vmem %s2, 160
    %v546 = vld [vmem:[%s545] sm:$0xff]
    %v547 = vld [vmem:[%s545 + $0x8] sm:$0xff]
    %v548 = vld [vmem:[%s545 + $0x10] sm:$0xff]
    %v549 = vld [vmem:[%s545 + $0x18] sm:$0xff]
    %s550 = scalar_lea.vmem %s3, 32
    %v551 = vld [vmem:[%s550] sm:$0xff]
    %v552 = vld [vmem:[%s550 + $0x8] sm:$0xff]
    %v553 = vld [vmem:[%s550 + $0x10] sm:$0xff]
    %v554 = vld [vmem:[%s550 + $0x18] sm:$0xff]
    %s555 = scalar_lea.vmem %s4, 32
    %v556 = vld [vmem:[%s555] sm:$0xff]
    %v557 = vld [vmem:[%s555 + $0x8] sm:$0xff]
    %v558 = vld [vmem:[%s555 + $0x10] sm:$0xff]
    %v559 = vld [vmem:[%s555 + $0x18] sm:$0xff]
    %560 = vrot.lane.b32.xlu0 %v531, 1
    %v561 = vpop.permute.xlu0 %560
    %562 = vrot.lane.b32.xlu0 %v532, 1
    %v563 = vpop.permute.xlu0 %562
    %564 = vrot.lane.b32.xlu0 %v533, 1
    %v565 = vpop.permute.xlu0 %564
    %566 = vrot.lane.b32.xlu0 %v534, 1
    %v567 = vpop.permute.xlu0 %566
    %v568 = vmul.f32 %v561, %v98
    %v569 = vmul.f32 %v563, %v98
    %v570 = vmul.f32 %v565, %v98
    %v571 = vmul.f32 %v567, %v98
    %v572 = vmul.f32 %v531, %v106
    %v573 = vmul.f32 %v532, %v106
    %v574 = vmul.f32 %v533, %v106
    %v575 = vmul.f32 %v534, %v106
    %576 = vrot.lane.b32.xlu0 %v531, 127
    %v577 = vpop.permute.xlu0 %576
    %578 = vrot.lane.b32.xlu0 %v532, 127
    %v579 = vpop.permute.xlu0 %578
    %580 = vrot.lane.b32.xlu0 %v533, 127
    %v581 = vpop.permute.xlu0 %580
    %582 = vrot.lane.b32.xlu0 %v534, 127
    %v583 = vpop.permute.xlu0 %582
    %v584 = vmul.f32 %v577, %v122
    %v585 = vmul.f32 %v579, %v122
    %v586 = vmul.f32 %v581, %v122
    %v587 = vmul.f32 %v583, %v122
    %v589 = vsel %vm127, %v541, 0
    %v592 = vsel %vm127, %v542, 0
    %v595 = vsel %vm127, %v543, 0
    %v598 = vsel %vm127, %v544, 0
    %600 = vmatprep.subr.mxu0 0.0
    %601 = vmatpush1.msra.mxu0 0.0
    %602 = vmatprep.subr.mxu0 0.0
    %603 = vmatpush1.msra.mxu0 0.0
    %604 = vmatprep.subr.mxu0 0.0
    %605 = vmatpush1.msra.mxu0 0.0
    %606 = vmatprep.subr.mxu0 0.0
    %607 = vmatpush1.msra.mxu0 0.0
    %608 = vmatprep.subr.mxu0 0.0
    %609 = vmatpush1.msra.mxu0 0.0
    %610 = vmatprep.subr.mxu0 0.0
    %611 = vmatpush1.msra.mxu0 0.0
    %612 = vmatprep.subr.mxu0 0.0
    %613 = vmatpush1.msra.mxu0 0.0
    %614 = vmatprep.subr.mxu0 0.0
    %615 = vmatpush1.msra.mxu0 0.0
    %616 = vmatprep.subr.mxu0 0.0
    %617 = vmatpush1.msra.mxu0 0.0
    %618 = vmatprep.subr.mxu0 0.0
    %619 = vmatpush1.msra.mxu0 0.0
    %620 = vmatprep.subr.mxu0 0.0
    %621 = vmatpush1.msra.mxu0 0.0
    %622 = vmatprep.subr.mxu0 0.0
    %623 = vmatpush1.msra.mxu0 0.0
    %624 = vmatprep.subr.mxu0 0.0
    %625 = vmatpush1.msra.mxu0 %v575
    %626 = vmatprep.subr.mxu0 0.0
    %627 = vmatpush1.msra.mxu0 %v574
    %628 = vmatprep.subr.mxu0 0.0
    %629 = vmatpush1.msra.mxu0 %v573
    %630 = vmatprep.subr.mxu0 0.0
    %631 = vmatpush1.msra.mxu0 %v572
    %632 = vmatprep.subr.mxu0 0.0
    %633 = vmatpush2.msra.mxu0 0.0
    %634 = vmatprep.subr.mxu0 0.0
    %635 = vmatpush2.msra.mxu0 0.0
    %636 = vmatprep.subr.mxu0 0.0
    %637 = vmatpush2.msra.mxu0 0.0
    %638 = vmatprep.subr.mxu0 0.0
    %639 = vmatpush2.msra.mxu0 0.0
    %640 = vmatprep.subr.mxu0 0.0
    %641 = vmatpush2.msra.mxu0 0.0
    %642 = vmatprep.subr.mxu0 0.0
    %643 = vmatpush2.msra.mxu0 0.0
    %644 = vmatprep.subr.mxu0 0.0
    %645 = vmatpush2.msra.mxu0 0.0
    %646 = vmatprep.subr.mxu0 0.0
    %647 = vmatpush2.msra.mxu0 0.0
    %648 = vmatprep.subr.mxu0 0.0
    %649 = vmatpush2.msra.mxu0 0.0
    %650 = vmatprep.subr.mxu0 0.0
    %651 = vmatpush2.msra.mxu0 0.0
    %652 = vmatprep.subr.mxu0 0.0
    %653 = vmatpush2.msra.mxu0 0.0
    %654 = vmatprep.subr.mxu0 0.0
    %655 = vmatpush2.msra.mxu0 0.0
    %656 = vmatprep.subr.mxu0 0.0
    %657 = vmatpush2.msra.mxu0 0.0
    %658 = vmatprep.subr.mxu0 0.0
    %659 = vmatpush2.msra.mxu0 0.0
    %660 = vmatprep.subr.mxu0 0.0
    %661 = vmatpush2.msra.mxu0 0.0
    %662 = vmatprep.subr.mxu0 0.0
    %663 = vmatpush2.msra.mxu0 0.0
    %664 = vmatprep.mubr.f32.mxu0 0.0
    %665 = vmatmul.mubr.f32.gmra.mxu0 %v589
    %v666 = vpop.f32.mrf.mxu0
    %v667 = vadd.f32 0.0, %v666
    %v668 = vpop.f32.mrf.mxu0
    %669 = vmatprep.mubr.f32.mxu0 0.0
    %670 = vmatmul.mubr.f32.gmra.mxu0 %v592
    %v671 = vpop.f32.mrf.mxu0
    %v672 = vadd.f32 0.0, %v671
    %v673 = vpop.f32.mrf.mxu0
    %674 = vmatprep.mubr.f32.mxu0 0.0
    %675 = vmatmul.mubr.f32.gmra.mxu0 %v595
    %v676 = vpop.f32.mrf.mxu0
    %v677 = vadd.f32 0.0, %v676
    %v678 = vpop.f32.mrf.mxu0
    %679 = vmatprep.mubr.f32.mxu0 0.0
    %680 = vmatmul.mubr.f32.gmra.mxu0 %v598
    %v681 = vpop.f32.mrf.mxu0
    %v682 = vadd.f32 0.0, %v681
    %v683 = vpop.f32.mrf.mxu0
    %684 = vdwg.mxu0
    %v686 = vsel %vm127, %v536, 0
    %v689 = vsel %vm127, %v537, 0
    %v692 = vsel %vm127, %v538, 0
    %v695 = vsel %vm127, %v539, 0
    %697 = vmatprep.subr.mxu0 0.0
    %698 = vmatpush1.msra.mxu0 0.0
    %699 = vmatprep.subr.mxu0 0.0
    %700 = vmatpush1.msra.mxu0 0.0
    %701 = vmatprep.subr.mxu0 0.0
    %702 = vmatpush1.msra.mxu0 0.0
    %703 = vmatprep.subr.mxu0 0.0
    %704 = vmatpush1.msra.mxu0 0.0
    %705 = vmatprep.subr.mxu0 0.0
    %706 = vmatpush1.msra.mxu0 0.0
    %707 = vmatprep.subr.mxu0 0.0
    %708 = vmatpush1.msra.mxu0 0.0
    %709 = vmatprep.subr.mxu0 0.0
    %710 = vmatpush1.msra.mxu0 0.0
    %711 = vmatprep.subr.mxu0 0.0
    %712 = vmatpush1.msra.mxu0 0.0
    %713 = vmatprep.subr.mxu0 0.0
    %714 = vmatpush1.msra.mxu0 0.0
    %715 = vmatprep.subr.mxu0 0.0
    %716 = vmatpush1.msra.mxu0 0.0
    %717 = vmatprep.subr.mxu0 0.0
    %718 = vmatpush1.msra.mxu0 0.0
    %719 = vmatprep.subr.mxu0 0.0
    %720 = vmatpush1.msra.mxu0 0.0
    %721 = vmatprep.subr.mxu0 0.0
    %722 = vmatpush1.msra.mxu0 %v571
    %723 = vmatprep.subr.mxu0 0.0
    %724 = vmatpush1.msra.mxu0 %v570
    %725 = vmatprep.subr.mxu0 0.0
    %726 = vmatpush1.msra.mxu0 %v569
    %727 = vmatprep.subr.mxu0 0.0
    %728 = vmatpush1.msra.mxu0 %v568
    %729 = vmatprep.subr.mxu0 0.0
    %730 = vmatpush2.msra.mxu0 0.0
    %731 = vmatprep.subr.mxu0 0.0
    %732 = vmatpush2.msra.mxu0 0.0
    %733 = vmatprep.subr.mxu0 0.0
    %734 = vmatpush2.msra.mxu0 0.0
    %735 = vmatprep.subr.mxu0 0.0
    %736 = vmatpush2.msra.mxu0 0.0
    %737 = vmatprep.subr.mxu0 0.0
    %738 = vmatpush2.msra.mxu0 0.0
    %739 = vmatprep.subr.mxu0 0.0
    %740 = vmatpush2.msra.mxu0 0.0
    %741 = vmatprep.subr.mxu0 0.0
    %742 = vmatpush2.msra.mxu0 0.0
    %743 = vmatprep.subr.mxu0 0.0
    %744 = vmatpush2.msra.mxu0 0.0
    %745 = vmatprep.subr.mxu0 0.0
    %746 = vmatpush2.msra.mxu0 0.0
    %747 = vmatprep.subr.mxu0 0.0
    %748 = vmatpush2.msra.mxu0 0.0
    %749 = vmatprep.subr.mxu0 0.0
    %750 = vmatpush2.msra.mxu0 0.0
    %751 = vmatprep.subr.mxu0 0.0
    %752 = vmatpush2.msra.mxu0 0.0
    %753 = vmatprep.subr.mxu0 0.0
    %754 = vmatpush2.msra.mxu0 0.0
    %755 = vmatprep.subr.mxu0 0.0
    %756 = vmatpush2.msra.mxu0 0.0
    %757 = vmatprep.subr.mxu0 0.0
    %758 = vmatpush2.msra.mxu0 0.0
    %759 = vmatprep.subr.mxu0 0.0
    %760 = vmatpush2.msra.mxu0 0.0
    %761 = vmatprep.mubr.f32.mxu0 0.0
    %762 = vmatmul.mubr.f32.gmra.mxu0 %v686
    %v763 = vpop.f32.mrf.mxu0
    %v764 = vadd.f32 %v667, %v763
    %v765 = vpop.f32.mrf.mxu0
    %766 = vmatprep.mubr.f32.mxu0 0.0
    %767 = vmatmul.mubr.f32.gmra.mxu0 %v689
    %v768 = vpop.f32.mrf.mxu0
    %v769 = vadd.f32 %v672, %v768
    %v770 = vpop.f32.mrf.mxu0
    %771 = vmatprep.mubr.f32.mxu0 0.0
    %772 = vmatmul.mubr.f32.gmra.mxu0 %v692
    %v773 = vpop.f32.mrf.mxu0
    %v774 = vadd.f32 %v677, %v773
    %v775 = vpop.f32.mrf.mxu0
    %776 = vmatprep.mubr.f32.mxu0 0.0
    %777 = vmatmul.mubr.f32.gmra.mxu0 %v695
    %v778 = vpop.f32.mrf.mxu0
    %v779 = vadd.f32 %v682, %v778
    %v780 = vpop.f32.mrf.mxu0
    %781 = vdwg.mxu0
    %v783 = vsel %vm127, %v546, 0
    %v786 = vsel %vm127, %v547, 0
    %v789 = vsel %vm127, %v548, 0
    %v792 = vsel %vm127, %v549, 0
    %794 = vmatprep.subr.mxu0 0.0
    %795 = vmatpush1.msra.mxu0 0.0
    %796 = vmatprep.subr.mxu0 0.0
    %797 = vmatpush1.msra.mxu0 0.0
    %798 = vmatprep.subr.mxu0 0.0
    %799 = vmatpush1.msra.mxu0 0.0
    %800 = vmatprep.subr.mxu0 0.0
    %801 = vmatpush1.msra.mxu0 0.0
    %802 = vmatprep.subr.mxu0 0.0
    %803 = vmatpush1.msra.mxu0 0.0
    %804 = vmatprep.subr.mxu0 0.0
    %805 = vmatpush1.msra.mxu0 0.0
    %806 = vmatprep.subr.mxu0 0.0
    %807 = vmatpush1.msra.mxu0 0.0
    %808 = vmatprep.subr.mxu0 0.0
    %809 = vmatpush1.msra.mxu0 0.0
    %810 = vmatprep.subr.mxu0 0.0
    %811 = vmatpush1.msra.mxu0 0.0
    %812 = vmatprep.subr.mxu0 0.0
    %813 = vmatpush1.msra.mxu0 0.0
    %814 = vmatprep.subr.mxu0 0.0
    %815 = vmatpush1.msra.mxu0 0.0
    %816 = vmatprep.subr.mxu0 0.0
    %817 = vmatpush1.msra.mxu0 0.0
    %818 = vmatprep.subr.mxu0 0.0
    %819 = vmatpush1.msra.mxu0 %v587
    %820 = vmatprep.subr.mxu0 0.0
    %821 = vmatpush1.msra.mxu0 %v586
    %822 = vmatprep.subr.mxu0 0.0
    %823 = vmatpush1.msra.mxu0 %v585
    %824 = vmatprep.subr.mxu0 0.0
    %825 = vmatpush1.msra.mxu0 %v584
    %826 = vmatprep.subr.mxu0 0.0
    %827 = vmatpush2.msra.mxu0 0.0
    %828 = vmatprep.subr.mxu0 0.0
    %829 = vmatpush2.msra.mxu0 0.0
    %830 = vmatprep.subr.mxu0 0.0
    %831 = vmatpush2.msra.mxu0 0.0
    %832 = vmatprep.subr.mxu0 0.0
    %833 = vmatpush2.msra.mxu0 0.0
    %834 = vmatprep.subr.mxu0 0.0
    %835 = vmatpush2.msra.mxu0 0.0
    %836 = vmatprep.subr.mxu0 0.0
    %837 = vmatpush2.msra.mxu0 0.0
    %838 = vmatprep.subr.mxu0 0.0
    %839 = vmatpush2.msra.mxu0 0.0
    %840 = vmatprep.subr.mxu0 0.0
    %841 = vmatpush2.msra.mxu0 0.0
    %842 = vmatprep.subr.mxu0 0.0
    %843 = vmatpush2.msra.mxu0 0.0
    %844 = vmatprep.subr.mxu0 0.0
    %845 = vmatpush2.msra.mxu0 0.0
    %846 = vmatprep.subr.mxu0 0.0
    %847 = vmatpush2.msra.mxu0 0.0
    %848 = vmatprep.subr.mxu0 0.0
    %849 = vmatpush2.msra.mxu0 0.0
    %850 = vmatprep.subr.mxu0 0.0
    %851 = vmatpush2.msra.mxu0 0.0
    %852 = vmatprep.subr.mxu0 0.0
    %853 = vmatpush2.msra.mxu0 0.0
    %854 = vmatprep.subr.mxu0 0.0
    %855 = vmatpush2.msra.mxu0 0.0
    %856 = vmatprep.subr.mxu0 0.0
    %857 = vmatpush2.msra.mxu0 0.0
    %858 = vmatprep.mubr.f32.mxu0 0.0
    %859 = vmatmul.mubr.f32.gmra.mxu0 %v783
    %v860 = vpop.f32.mrf.mxu0
    %v861 = vadd.f32 0.0, %v860
    %v862 = vpop.f32.mrf.mxu0
    %863 = vmatprep.mubr.f32.mxu0 0.0
    %864 = vmatmul.mubr.f32.gmra.mxu0 %v786
    %v865 = vpop.f32.mrf.mxu0
    %v866 = vadd.f32 0.0, %v865
    %v867 = vpop.f32.mrf.mxu0
    %868 = vmatprep.mubr.f32.mxu0 0.0
    %869 = vmatmul.mubr.f32.gmra.mxu0 %v789
    %v870 = vpop.f32.mrf.mxu0
    %v871 = vadd.f32 0.0, %v870
    %v872 = vpop.f32.mrf.mxu0
    %873 = vmatprep.mubr.f32.mxu0 0.0
    %874 = vmatmul.mubr.f32.gmra.mxu0 %v792
    %v875 = vpop.f32.mrf.mxu0
    %v876 = vadd.f32 0.0, %v875
    %v877 = vpop.f32.mrf.mxu0
    %878 = vdwg.mxu0
    %v879 = vadd.f32 %v764, %v861
    %v880 = vadd.f32 %v769, %v866
    %v881 = vadd.f32 %v774, %v871
    %v882 = vadd.f32 %v779, %v876
    %883 = vadd.xlane.f32.xlu0 %v879
    %v884 = vpop.xlane.xlu0 %883
    %885 = vadd.xlane.f32.xlu0 %v880
    %v886 = vpop.xlane.xlu0 %885
    %887 = vadd.xlane.f32.xlu0 %v881
    %v888 = vpop.xlane.xlu0 %887
    %889 = vadd.xlane.f32.xlu0 %v882
    %v890 = vpop.xlane.xlu0 %889
    %v891 = vmul.f32 %v879, %v879
    %v892 = vmul.f32 %v880, %v880
    %v893 = vmul.f32 %v881, %v881
    %v894 = vmul.f32 %v882, %v882
    %895 = vadd.xlane.f32.xlu0 %v891
    %v896 = vpop.xlane.xlu0 %895
    %897 = vadd.xlane.f32.xlu0 %v892
    %v898 = vpop.xlane.xlu0 %897
    %899 = vadd.xlane.f32.xlu0 %v893
    %v900 = vpop.xlane.xlu0 %899
    %901 = vadd.xlane.f32.xlu0 %v894
    %v902 = vpop.xlane.xlu0 %901
    %v903 = vmul.f32 %v884, 0.03125
    %v904 = vmul.f32 %v886, 0.03125
    %v905 = vmul.f32 %v888, 0.03125
    %v906 = vmul.f32 %v890, 0.03125
    %v907 = vmul.f32 %v896, 0.03125
    %v908 = vmul.f32 %v898, 0.03125
    %v909 = vmul.f32 %v900, 0.03125
    %v910 = vmul.f32 %v902, 0.03125
    %v911 = vmul.f32 %v903, %v903
    %v912 = vmul.f32 %v904, %v904
    %v913 = vmul.f32 %v905, %v905
    %v914 = vmul.f32 %v906, %v906
    %v915 = vsub.f32 %v907, %v911
    %v916 = vsub.f32 %v908, %v912
    %v917 = vsub.f32 %v909, %v913
    %v918 = vsub.f32 %v910, %v914
    %v919 = vmax.f32 %v915, 0.0
    %v920 = vmax.f32 %v916, 0.0
    %v921 = vmax.f32 %v917, 0.0
    %v922 = vmax.f32 %v918, 0.0
    %v923 = vadd.f32 %v919, 1e-05
    %v924 = vadd.f32 %v920, 1e-05
    %v925 = vadd.f32 %v921, 1e-05
    %v926 = vadd.f32 %v922, 1e-05
    %v927 = vrsqrt.pop %v923
    %v928 = vrsqrt.pop %v924
    %v929 = vrsqrt.pop %v925
    %v930 = vrsqrt.pop %v926
    %v931 = vmul.f32 %v551, %v927
    %v932 = vmul.f32 %v552, %v928
    %v933 = vmul.f32 %v553, %v929
    %v934 = vmul.f32 %v554, %v930
    %v935 = vmul.f32 %v903, %v931
    %v936 = vmul.f32 %v904, %v932
    %v937 = vmul.f32 %v905, %v933
    %v938 = vmul.f32 %v906, %v934
    %v939 = vsub.f32 %v556, %v935
    %v940 = vsub.f32 %v557, %v936
    %v941 = vsub.f32 %v558, %v937
    %v942 = vsub.f32 %v559, %v938
    %944 = vset.pattern.permute.xlu0 0
    %945 = vperm.xlu0 %944, %v931
    %v946 = vpop.permute.xlu0 %945
    %949 = vset.pattern.permute.xlu0 0
    %950 = vperm.xlu0 %949, %v932
    %v951 = vpop.permute.xlu0 %950
    %954 = vset.pattern.permute.xlu0 0
    %955 = vperm.xlu0 %954, %v933
    %v956 = vpop.permute.xlu0 %955
    %959 = vset.pattern.permute.xlu0 0
    %960 = vperm.xlu0 %959, %v934
    %v961 = vpop.permute.xlu0 %960
    %v963 = vmul.f32 %v879, %v946
    %v964 = vmul.f32 %v880, %v951
    %v965 = vmul.f32 %v881, %v956
    %v966 = vmul.f32 %v882, %v961
    %968 = vset.pattern.permute.xlu0 0
    %969 = vperm.xlu0 %968, %v939
    %v970 = vpop.permute.xlu0 %969
    %973 = vset.pattern.permute.xlu0 0
    %974 = vperm.xlu0 %973, %v940
    %v975 = vpop.permute.xlu0 %974
    %978 = vset.pattern.permute.xlu0 0
    %979 = vperm.xlu0 %978, %v941
    %v980 = vpop.permute.xlu0 %979
    %983 = vset.pattern.permute.xlu0 0
    %984 = vperm.xlu0 %983, %v942
    %v985 = vpop.permute.xlu0 %984
    %v987 = vadd.f32 %v963, %v970
    %v988 = vadd.f32 %v964, %v975
    %v989 = vadd.f32 %v965, %v980
    %v990 = vadd.f32 %v966, %v985
    %v991 = vmax.f32 %v987, 0.0
    %v992 = vmax.f32 %v988, 0.0
    %v993 = vmax.f32 %v989, 0.0
    %v994 = vmax.f32 %v990, 0.0
    %v995 = vld [vmem:[#allocation5] sm:$0xff]
    %v996 = vld [vmem:[#allocation5 + $0x8] sm:$0xff]
    %v997 = vld [vmem:[#allocation5 + $0x10] sm:$0xff]
    %v998 = vld [vmem:[#allocation5 + $0x18] sm:$0xff]
    %s999 = scalar_lea.vmem [#allocation5], 32
    %v1000 = vld [vmem:[%s999] sm:$0xff]
    %v1001 = vld [vmem:[%s999 + $0x8] sm:$0xff]
    %v1002 = vld [vmem:[%s999 + $0x10] sm:$0xff]
    %v1003 = vld [vmem:[%s999 + $0x18] sm:$0xff]
    %s1004 = scalar_lea.vmem [#allocation5], 64
    %v1005 = vld [vmem:[%s1004] sm:$0xff]
    %v1006 = vld [vmem:[%s1004 + $0x8] sm:$0xff]
    %v1007 = vld [vmem:[%s1004 + $0x10] sm:$0xff]
    %v1008 = vld [vmem:[%s1004 + $0x18] sm:$0xff]
    %v1009 = vld [vmem:[%s6] sm:$0xff]
    %v1010 = vld [vmem:[%s6 + $0x8] sm:$0xff]
    %v1011 = vld [vmem:[%s6 + $0x10] sm:$0xff]
    %v1012 = vld [vmem:[%s6 + $0x18] sm:$0xff]
    %v1013 = vld [vmem:[%s7] sm:$0xff]
    %v1014 = vld [vmem:[%s7 + $0x8] sm:$0xff]
    %v1015 = vld [vmem:[%s7 + $0x10] sm:$0xff]
    %v1016 = vld [vmem:[%s7 + $0x18] sm:$0xff]
    %1017 = vrot.lane.b32.xlu0 %v991, 1
    %v1018 = vpop.permute.xlu0 %1017
    %1019 = vrot.lane.b32.xlu0 %v992, 1
    %v1020 = vpop.permute.xlu0 %1019
    %1021 = vrot.lane.b32.xlu0 %v993, 1
    %v1022 = vpop.permute.xlu0 %1021
    %1023 = vrot.lane.b32.xlu0 %v994, 1
    %v1024 = vpop.permute.xlu0 %1023
    %v1025 = vmul.f32 %v1018, %v98
    %v1026 = vmul.f32 %v1020, %v98
    %v1027 = vmul.f32 %v1022, %v98
    %v1028 = vmul.f32 %v1024, %v98
    %v1029 = vmul.f32 %v991, %v106
    %v1030 = vmul.f32 %v992, %v106
    %v1031 = vmul.f32 %v993, %v106
    %v1032 = vmul.f32 %v994, %v106
    %1033 = vrot.lane.b32.xlu0 %v991, 127
    %v1034 = vpop.permute.xlu0 %1033
    %1035 = vrot.lane.b32.xlu0 %v992, 127
    %v1036 = vpop.permute.xlu0 %1035
    %1037 = vrot.lane.b32.xlu0 %v993, 127
    %v1038 = vpop.permute.xlu0 %1037
    %1039 = vrot.lane.b32.xlu0 %v994, 127
    %v1040 = vpop.permute.xlu0 %1039
    %v1041 = vmul.f32 %v1034, %v122
    %v1042 = vmul.f32 %v1036, %v122
    %v1043 = vmul.f32 %v1038, %v122
    %v1044 = vmul.f32 %v1040, %v122
    %v1046 = vsel %vm127, %v1000, 0
    %v1049 = vsel %vm127, %v1001, 0
    %v1052 = vsel %vm127, %v1002, 0
    %v1055 = vsel %vm127, %v1003, 0
    %1057 = vmatprep.subr.mxu0 0.0
    %1058 = vmatpush1.msra.mxu0 0.0
    %1059 = vmatprep.subr.mxu0 0.0
    %1060 = vmatpush1.msra.mxu0 0.0
    %1061 = vmatprep.subr.mxu0 0.0
    %1062 = vmatpush1.msra.mxu0 0.0
    %1063 = vmatprep.subr.mxu0 0.0
    %1064 = vmatpush1.msra.mxu0 0.0
    %1065 = vmatprep.subr.mxu0 0.0
    %1066 = vmatpush1.msra.mxu0 0.0
    %1067 = vmatprep.subr.mxu0 0.0
    %1068 = vmatpush1.msra.mxu0 0.0
    %1069 = vmatprep.subr.mxu0 0.0
    %1070 = vmatpush1.msra.mxu0 0.0
    %1071 = vmatprep.subr.mxu0 0.0
    %1072 = vmatpush1.msra.mxu0 0.0
    %1073 = vmatprep.subr.mxu0 0.0
    %1074 = vmatpush1.msra.mxu0 0.0
    %1075 = vmatprep.subr.mxu0 0.0
    %1076 = vmatpush1.msra.mxu0 0.0
    %1077 = vmatprep.subr.mxu0 0.0
    %1078 = vmatpush1.msra.mxu0 0.0
    %1079 = vmatprep.subr.mxu0 0.0
    %1080 = vmatpush1.msra.mxu0 0.0
    %1081 = vmatprep.subr.mxu0 0.0
    %1082 = vmatpush1.msra.mxu0 %v1032
    %1083 = vmatprep.subr.mxu0 0.0
    %1084 = vmatpush1.msra.mxu0 %v1031
    %1085 = vmatprep.subr.mxu0 0.0
    %1086 = vmatpush1.msra.mxu0 %v1030
    %1087 = vmatprep.subr.mxu0 0.0
    %1088 = vmatpush1.msra.mxu0 %v1029
    %1089 = vmatprep.subr.mxu0 0.0
    %1090 = vmatpush2.msra.mxu0 0.0
    %1091 = vmatprep.subr.mxu0 0.0
    %1092 = vmatpush2.msra.mxu0 0.0
    %1093 = vmatprep.subr.mxu0 0.0
    %1094 = vmatpush2.msra.mxu0 0.0
    %1095 = vmatprep.subr.mxu0 0.0
    %1096 = vmatpush2.msra.mxu0 0.0
    %1097 = vmatprep.subr.mxu0 0.0
    %1098 = vmatpush2.msra.mxu0 0.0
    %1099 = vmatprep.subr.mxu0 0.0
    %1100 = vmatpush2.msra.mxu0 0.0
    %1101 = vmatprep.subr.mxu0 0.0
    %1102 = vmatpush2.msra.mxu0 0.0
    %1103 = vmatprep.subr.mxu0 0.0
    %1104 = vmatpush2.msra.mxu0 0.0
    %1105 = vmatprep.subr.mxu0 0.0
    %1106 = vmatpush2.msra.mxu0 0.0
    %1107 = vmatprep.subr.mxu0 0.0
    %1108 = vmatpush2.msra.mxu0 0.0
    %1109 = vmatprep.subr.mxu0 0.0
    %1110 = vmatpush2.msra.mxu0 0.0
    %1111 = vmatprep.subr.mxu0 0.0
    %1112 = vmatpush2.msra.mxu0 0.0
    %1113 = vmatprep.subr.mxu0 0.0
    %1114 = vmatpush2.msra.mxu0 0.0
    %1115 = vmatprep.subr.mxu0 0.0
    %1116 = vmatpush2.msra.mxu0 0.0
    %1117 = vmatprep.subr.mxu0 0.0
    %1118 = vmatpush2.msra.mxu0 0.0
    %1119 = vmatprep.subr.mxu0 0.0
    %1120 = vmatpush2.msra.mxu0 0.0
    %1121 = vmatprep.mubr.f32.mxu0 0.0
    %1122 = vmatmul.mubr.f32.gmra.mxu0 %v1046
    %v1123 = vpop.f32.mrf.mxu0
    %v1124 = vadd.f32 0.0, %v1123
    %v1125 = vpop.f32.mrf.mxu0
    %1126 = vmatprep.mubr.f32.mxu0 0.0
    %1127 = vmatmul.mubr.f32.gmra.mxu0 %v1049
    %v1128 = vpop.f32.mrf.mxu0
    %v1129 = vadd.f32 0.0, %v1128
    %v1130 = vpop.f32.mrf.mxu0
    %1131 = vmatprep.mubr.f32.mxu0 0.0
    %1132 = vmatmul.mubr.f32.gmra.mxu0 %v1052
    %v1133 = vpop.f32.mrf.mxu0
    %v1134 = vadd.f32 0.0, %v1133
    %v1135 = vpop.f32.mrf.mxu0
    %1136 = vmatprep.mubr.f32.mxu0 0.0
    %1137 = vmatmul.mubr.f32.gmra.mxu0 %v1055
    %v1138 = vpop.f32.mrf.mxu0
    %v1139 = vadd.f32 0.0, %v1138
    %v1140 = vpop.f32.mrf.mxu0
    %1141 = vdwg.mxu0
    %v1143 = vsel %vm127, %v995, 0
    %v1146 = vsel %vm127, %v996, 0
    %v1149 = vsel %vm127, %v997, 0
    %v1152 = vsel %vm127, %v998, 0
    %1154 = vmatprep.subr.mxu0 0.0
    %1155 = vmatpush1.msra.mxu0 0.0
    %1156 = vmatprep.subr.mxu0 0.0
    %1157 = vmatpush1.msra.mxu0 0.0
    %1158 = vmatprep.subr.mxu0 0.0
    %1159 = vmatpush1.msra.mxu0 0.0
    %1160 = vmatprep.subr.mxu0 0.0
    %1161 = vmatpush1.msra.mxu0 0.0
    %1162 = vmatprep.subr.mxu0 0.0
    %1163 = vmatpush1.msra.mxu0 0.0
    %1164 = vmatprep.subr.mxu0 0.0
    %1165 = vmatpush1.msra.mxu0 0.0
    %1166 = vmatprep.subr.mxu0 0.0
    %1167 = vmatpush1.msra.mxu0 0.0
    %1168 = vmatprep.subr.mxu0 0.0
    %1169 = vmatpush1.msra.mxu0 0.0
    %1170 = vmatprep.subr.mxu0 0.0
    %1171 = vmatpush1.msra.mxu0 0.0
    %1172 = vmatprep.subr.mxu0 0.0
    %1173 = vmatpush1.msra.mxu0 0.0
    %1174 = vmatprep.subr.mxu0 0.0
    %1175 = vmatpush1.msra.mxu0 0.0
    %1176 = vmatprep.subr.mxu0 0.0
    %1177 = vmatpush1.msra.mxu0 0.0
    %1178 = vmatprep.subr.mxu0 0.0
    %1179 = vmatpush1.msra.mxu0 %v1028
    %1180 = vmatprep.subr.mxu0 0.0
    %1181 = vmatpush1.msra.mxu0 %v1027
    %1182 = vmatprep.subr.mxu0 0.0
    %1183 = vmatpush1.msra.mxu0 %v1026
    %1184 = vmatprep.subr.mxu0 0.0
    %1185 = vmatpush1.msra.mxu0 %v1025
    %1186 = vmatprep.subr.mxu0 0.0
    %1187 = vmatpush2.msra.mxu0 0.0
    %1188 = vmatprep.subr.mxu0 0.0
    %1189 = vmatpush2.msra.mxu0 0.0
    %1190 = vmatprep.subr.mxu0 0.0
    %1191 = vmatpush2.msra.mxu0 0.0
    %1192 = vmatprep.subr.mxu0 0.0
    %1193 = vmatpush2.msra.mxu0 0.0
    %1194 = vmatprep.subr.mxu0 0.0
    %1195 = vmatpush2.msra.mxu0 0.0
    %1196 = vmatprep.subr.mxu0 0.0
    %1197 = vmatpush2.msra.mxu0 0.0
    %1198 = vmatprep.subr.mxu0 0.0
    %1199 = vmatpush2.msra.mxu0 0.0
    %1200 = vmatprep.subr.mxu0 0.0
    %1201 = vmatpush2.msra.mxu0 0.0
    %1202 = vmatprep.subr.mxu0 0.0
    %1203 = vmatpush2.msra.mxu0 0.0
    %1204 = vmatprep.subr.mxu0 0.0
    %1205 = vmatpush2.msra.mxu0 0.0
    %1206 = vmatprep.subr.mxu0 0.0
    %1207 = vmatpush2.msra.mxu0 0.0
    %1208 = vmatprep.subr.mxu0 0.0
    %1209 = vmatpush2.msra.mxu0 0.0
    %1210 = vmatprep.subr.mxu0 0.0
    %1211 = vmatpush2.msra.mxu0 0.0
    %1212 = vmatprep.subr.mxu0 0.0
    %1213 = vmatpush2.msra.mxu0 0.0
    %1214 = vmatprep.subr.mxu0 0.0
    %1215 = vmatpush2.msra.mxu0 0.0
    %1216 = vmatprep.subr.mxu0 0.0
    %1217 = vmatpush2.msra.mxu0 0.0
    %1218 = vmatprep.mubr.f32.mxu0 0.0
    %1219 = vmatmul.mubr.f32.gmra.mxu0 %v1143
    %v1220 = vpop.f32.mrf.mxu0
    %v1221 = vadd.f32 %v1124, %v1220
    %v1222 = vpop.f32.mrf.mxu0
    %1223 = vmatprep.mubr.f32.mxu0 0.0
    %1224 = vmatmul.mubr.f32.gmra.mxu0 %v1146
    %v1225 = vpop.f32.mrf.mxu0
    %v1226 = vadd.f32 %v1129, %v1225
    %v1227 = vpop.f32.mrf.mxu0
    %1228 = vmatprep.mubr.f32.mxu0 0.0
    %1229 = vmatmul.mubr.f32.gmra.mxu0 %v1149
    %v1230 = vpop.f32.mrf.mxu0
    %v1231 = vadd.f32 %v1134, %v1230
    %v1232 = vpop.f32.mrf.mxu0
    %1233 = vmatprep.mubr.f32.mxu0 0.0
    %1234 = vmatmul.mubr.f32.gmra.mxu0 %v1152
    %v1235 = vpop.f32.mrf.mxu0
    %v1236 = vadd.f32 %v1139, %v1235
    %v1237 = vpop.f32.mrf.mxu0
    %1238 = vdwg.mxu0
    %v1240 = vsel %vm127, %v1005, 0
    %v1243 = vsel %vm127, %v1006, 0
    %v1246 = vsel %vm127, %v1007, 0
    %v1249 = vsel %vm127, %v1008, 0
    %1251 = vmatprep.subr.mxu0 0.0
    %1252 = vmatpush1.msra.mxu0 0.0
    %1253 = vmatprep.subr.mxu0 0.0
    %1254 = vmatpush1.msra.mxu0 0.0
    %1255 = vmatprep.subr.mxu0 0.0
    %1256 = vmatpush1.msra.mxu0 0.0
    %1257 = vmatprep.subr.mxu0 0.0
    %1258 = vmatpush1.msra.mxu0 0.0
    %1259 = vmatprep.subr.mxu0 0.0
    %1260 = vmatpush1.msra.mxu0 0.0
    %1261 = vmatprep.subr.mxu0 0.0
    %1262 = vmatpush1.msra.mxu0 0.0
    %1263 = vmatprep.subr.mxu0 0.0
    %1264 = vmatpush1.msra.mxu0 0.0
    %1265 = vmatprep.subr.mxu0 0.0
    %1266 = vmatpush1.msra.mxu0 0.0
    %1267 = vmatprep.subr.mxu0 0.0
    %1268 = vmatpush1.msra.mxu0 0.0
    %1269 = vmatprep.subr.mxu0 0.0
    %1270 = vmatpush1.msra.mxu0 0.0
    %1271 = vmatprep.subr.mxu0 0.0
    %1272 = vmatpush1.msra.mxu0 0.0
    %1273 = vmatprep.subr.mxu0 0.0
    %1274 = vmatpush1.msra.mxu0 0.0
    %1275 = vmatprep.subr.mxu0 0.0
    %1276 = vmatpush1.msra.mxu0 %v1044
    %1277 = vmatprep.subr.mxu0 0.0
    %1278 = vmatpush1.msra.mxu0 %v1043
    %1279 = vmatprep.subr.mxu0 0.0
    %1280 = vmatpush1.msra.mxu0 %v1042
    %1281 = vmatprep.subr.mxu0 0.0
    %1282 = vmatpush1.msra.mxu0 %v1041
    %1283 = vmatprep.subr.mxu0 0.0
    %1284 = vmatpush2.msra.mxu0 0.0
    %1285 = vmatprep.subr.mxu0 0.0
    %1286 = vmatpush2.msra.mxu0 0.0
    %1287 = vmatprep.subr.mxu0 0.0
    %1288 = vmatpush2.msra.mxu0 0.0
    %1289 = vmatprep.subr.mxu0 0.0
    %1290 = vmatpush2.msra.mxu0 0.0
    %1291 = vmatprep.subr.mxu0 0.0
    %1292 = vmatpush2.msra.mxu0 0.0
    %1293 = vmatprep.subr.mxu0 0.0
    %1294 = vmatpush2.msra.mxu0 0.0
    %1295 = vmatprep.subr.mxu0 0.0
    %1296 = vmatpush2.msra.mxu0 0.0
    %1297 = vmatprep.subr.mxu0 0.0
    %1298 = vmatpush2.msra.mxu0 0.0
    %1299 = vmatprep.subr.mxu0 0.0
    %1300 = vmatpush2.msra.mxu0 0.0
    %1301 = vmatprep.subr.mxu0 0.0
    %1302 = vmatpush2.msra.mxu0 0.0
    %1303 = vmatprep.subr.mxu0 0.0
    %1304 = vmatpush2.msra.mxu0 0.0
    %1305 = vmatprep.subr.mxu0 0.0
    %1306 = vmatpush2.msra.mxu0 0.0
    %1307 = vmatprep.subr.mxu0 0.0
    %1308 = vmatpush2.msra.mxu0 0.0
    %1309 = vmatprep.subr.mxu0 0.0
    %1310 = vmatpush2.msra.mxu0 0.0
    %1311 = vmatprep.subr.mxu0 0.0
    %1312 = vmatpush2.msra.mxu0 0.0
    %1313 = vmatprep.subr.mxu0 0.0
    %1314 = vmatpush2.msra.mxu0 0.0
    %1315 = vmatprep.mubr.f32.mxu0 0.0
    %1316 = vmatmul.mubr.f32.gmra.mxu0 %v1240
    %v1317 = vpop.f32.mrf.mxu0
    %v1318 = vadd.f32 0.0, %v1317
    %v1319 = vpop.f32.mrf.mxu0
    %1320 = vmatprep.mubr.f32.mxu0 0.0
    %1321 = vmatmul.mubr.f32.gmra.mxu0 %v1243
    %v1322 = vpop.f32.mrf.mxu0
    %v1323 = vadd.f32 0.0, %v1322
    %v1324 = vpop.f32.mrf.mxu0
    %1325 = vmatprep.mubr.f32.mxu0 0.0
    %1326 = vmatmul.mubr.f32.gmra.mxu0 %v1246
    %v1327 = vpop.f32.mrf.mxu0
    %v1328 = vadd.f32 0.0, %v1327
    %v1329 = vpop.f32.mrf.mxu0
    %1330 = vmatprep.mubr.f32.mxu0 0.0
    %1331 = vmatmul.mubr.f32.gmra.mxu0 %v1249
    %v1332 = vpop.f32.mrf.mxu0
    %v1333 = vadd.f32 0.0, %v1332
    %v1334 = vpop.f32.mrf.mxu0
    %1335 = vdwg.mxu0
    %v1336 = vadd.f32 %v1221, %v1318
    %v1337 = vadd.f32 %v1226, %v1323
    %v1338 = vadd.f32 %v1231, %v1328
    %v1339 = vadd.f32 %v1236, %v1333
    %1340 = vadd.xlane.f32.xlu0 %v1336
    %v1341 = vpop.xlane.xlu0 %1340
    %1342 = vadd.xlane.f32.xlu0 %v1337
    %v1343 = vpop.xlane.xlu0 %1342
    %1344 = vadd.xlane.f32.xlu0 %v1338
    %v1345 = vpop.xlane.xlu0 %1344
    %1346 = vadd.xlane.f32.xlu0 %v1339
    %v1347 = vpop.xlane.xlu0 %1346
    %v1348 = vmul.f32 %v1336, %v1336
    %v1349 = vmul.f32 %v1337, %v1337
    %v1350 = vmul.f32 %v1338, %v1338
    %v1351 = vmul.f32 %v1339, %v1339
    %1352 = vadd.xlane.f32.xlu0 %v1348
    %v1353 = vpop.xlane.xlu0 %1352
    %1354 = vadd.xlane.f32.xlu0 %v1349
    %v1355 = vpop.xlane.xlu0 %1354
    %1356 = vadd.xlane.f32.xlu0 %v1350
    %v1357 = vpop.xlane.xlu0 %1356
    %1358 = vadd.xlane.f32.xlu0 %v1351
    %v1359 = vpop.xlane.xlu0 %1358
    %v1360 = vmul.f32 %v1341, 0.03125
    %v1361 = vmul.f32 %v1343, 0.03125
    %v1362 = vmul.f32 %v1345, 0.03125
    %v1363 = vmul.f32 %v1347, 0.03125
    %v1364 = vmul.f32 %v1353, 0.03125
    %v1365 = vmul.f32 %v1355, 0.03125
    %v1366 = vmul.f32 %v1357, 0.03125
    %v1367 = vmul.f32 %v1359, 0.03125
    %v1368 = vmul.f32 %v1360, %v1360
    %v1369 = vmul.f32 %v1361, %v1361
    %v1370 = vmul.f32 %v1362, %v1362
    %v1371 = vmul.f32 %v1363, %v1363
    %v1372 = vsub.f32 %v1364, %v1368
    %v1373 = vsub.f32 %v1365, %v1369
    %v1374 = vsub.f32 %v1366, %v1370
    %v1375 = vsub.f32 %v1367, %v1371
    %v1376 = vmax.f32 %v1372, 0.0
    %v1377 = vmax.f32 %v1373, 0.0
    %v1378 = vmax.f32 %v1374, 0.0
    %v1379 = vmax.f32 %v1375, 0.0
    %v1380 = vadd.f32 %v1376, 1e-05
    %v1381 = vadd.f32 %v1377, 1e-05
    %v1382 = vadd.f32 %v1378, 1e-05
    %v1383 = vadd.f32 %v1379, 1e-05
    %v1384 = vrsqrt.pop %v1380
    %v1385 = vrsqrt.pop %v1381
    %v1386 = vrsqrt.pop %v1382
    %v1387 = vrsqrt.pop %v1383
    %v1388 = vmul.f32 %v1009, %v1384
    %v1389 = vmul.f32 %v1010, %v1385
    %v1390 = vmul.f32 %v1011, %v1386
    %v1391 = vmul.f32 %v1012, %v1387
    %v1392 = vmul.f32 %v1360, %v1388
    %v1393 = vmul.f32 %v1361, %v1389
    %v1394 = vmul.f32 %v1362, %v1390
    %v1395 = vmul.f32 %v1363, %v1391
    %v1396 = vsub.f32 %v1013, %v1392
    %v1397 = vsub.f32 %v1014, %v1393
    %v1398 = vsub.f32 %v1015, %v1394
    %v1399 = vsub.f32 %v1016, %v1395
    %1401 = vset.pattern.permute.xlu0 0
    %1402 = vperm.xlu0 %1401, %v1388
    %v1403 = vpop.permute.xlu0 %1402
    %1406 = vset.pattern.permute.xlu0 0
    %1407 = vperm.xlu0 %1406, %v1389
    %v1408 = vpop.permute.xlu0 %1407
    %1411 = vset.pattern.permute.xlu0 0
    %1412 = vperm.xlu0 %1411, %v1390
    %v1413 = vpop.permute.xlu0 %1412
    %1416 = vset.pattern.permute.xlu0 0
    %1417 = vperm.xlu0 %1416, %v1391
    %v1418 = vpop.permute.xlu0 %1417
    %v1420 = vmul.f32 %v1336, %v1403
    %v1421 = vmul.f32 %v1337, %v1408
    %v1422 = vmul.f32 %v1338, %v1413
    %v1423 = vmul.f32 %v1339, %v1418
    %1425 = vset.pattern.permute.xlu0 0
    %1426 = vperm.xlu0 %1425, %v1396
    %v1427 = vpop.permute.xlu0 %1426
    %1430 = vset.pattern.permute.xlu0 0
    %1431 = vperm.xlu0 %1430, %v1397
    %v1432 = vpop.permute.xlu0 %1431
    %1435 = vset.pattern.permute.xlu0 0
    %1436 = vperm.xlu0 %1435, %v1398
    %v1437 = vpop.permute.xlu0 %1436
    %1440 = vset.pattern.permute.xlu0 0
    %1441 = vperm.xlu0 %1440, %v1399
    %v1442 = vpop.permute.xlu0 %1441
    %v1444 = vadd.f32 %v1420, %v1427
    %v1445 = vadd.f32 %v1421, %v1432
    %v1446 = vadd.f32 %v1422, %v1437
    %v1447 = vadd.f32 %v1423, %v1442
    %v1448 = vadd.f32 %v1444, %v58
    %v1449 = vadd.f32 %v1445, %v59
    %v1450 = vadd.f32 %v1446, %v60
    %v1451 = vadd.f32 %v1447, %v61
    %v1452 = vmax.f32 %v1448, 0.0
    %v1453 = vmax.f32 %v1449, 0.0
    %v1454 = vmax.f32 %v1450, 0.0
    %v1455 = vmax.f32 %v1451, 0.0
    %1456 = vst [vmem:[#allocation7] sm:$0xff] %v1452
    %1457 = vst [vmem:[#allocation7 + $0x8] sm:$0xff] %v1453
    %1458 = vst [vmem:[#allocation7 + $0x10] sm:$0xff] %v1454
    %1459 = vst [vmem:[#allocation7 + $0x18] sm:$0xff] %v1455
    // Predicated region
    $region42: #{tpu_custom_call.1} parent=1 // pred_check
      _
    $region43: #{tpu_custom_call.1} parent=1 // pred_check_branch
      %1461 = sbr.rel (0) target = $region45
    $region44: #{tpu_custom_call.1} parent=1 // pred_region
      %s1463 = ssub.s32 512, 512
      %1464 = vsyncadd [#allocation4], %s1463
      %s1465 = sshll.u32 [#allocation7], 4
      %s1466 = int_to_ptr.vmem [resolvable:$true] %s1465
      %1471 = dma.vmem_to_hbm [thread:$0]  %s1466, 512, %s8, [#allocation4], 128, 128, 8
    $region45: #{tpu_custom_call.1} parent=1 // pred_fallthru
      _
    // Predicated region
    $region46: #{tpu_custom_call.1} parent=1 // pred_check
      _
    $region47: #{tpu_custom_call.1} parent=1 // pred_check_branch
      %1473 = sbr.rel (0) target = $region49
    $region48: #{tpu_custom_call.1} parent=1 // pred_region
      %1474 = dma.done [#allocation4], 512
    $region49: #{tpu_custom_call.1} parent=1 // pred_fallthru
      _
    %1475 = vsyncpa [#allocation3], 1
    %1476 = vsyncpa [#allocation6], 1
    %1477 = vsyncpa [#allocation4], 1

</llo_original>
